<compile_context>
chip_gen: v6e
topology: v6e:2x2x1
jax: 0.10.0
libtpu: 0.0.40
codegen_flags: <defaults>
</compile_context>

<pallas_src>
import functools

import jax
import jax.numpy as jnp
from jax.experimental import pallas as pl
from jax.experimental.pallas import tpu as pltpu

_NEG = -1e30  # "minus infinity" that stays NaN-free through exp/max


def _round_up(x, m):
    return (x + m - 1) // m * m


def _decoder_kernel(idx_ref,                       # SMEM (Bp,) int32   [scalar prefetch]
                    emb_gi_hbm,                    # HBM  (Vp, 3*Hp) f32 (folded emb@W_ih+b_ih)
                    h0_ref,                        # VMEM (Bp, Hp)   f32
                    whh_ref,                       # VMEM (Hp, 3*Hp) bf16
                    bhh_ref,                       # VMEM (1, 3*Hp)  f32
                    wout_ref,                      # VMEM (Hp, TV)   bf16   (vocab tile j)
                    bout_ref,                      # VMEM (1, TV)    f32    (vocab tile j)
                    logp_ref,                      # VMEM (Bp, Vp)   f32 out (resident)
                    hnew_ref,                      # VMEM (Bp, Hp)   f32 out (resident)
                    gi_sc,                         # VMEM (Bp, 3*Hp) f32    gathered gi rows
                    h_sc,                          # VMEM (Bp, Hp)   f32    new hidden
                    logits_sc,                     # VMEM (nt, Bp, TV) f32  raw logit tiles
                    m_sc,                          # VMEM (Bp, 1)    f32    running max
                    l_sc,                          # VMEM (Bp, 1)    f32    running sum
                    sem,                           # DMA sems (Bp,)
                    *, hp, tv, nt, bp):
    j = pl.program_id(0)

    # ---------------- step 0: gather gi rows from HBM + one GRU cell update ----------------
    @pl.when(j == 0)
    def _gru():
        def row_copy(b):
            return pltpu.make_async_copy(
                emb_gi_hbm.at[pl.ds(idx_ref[b], 1), :],   # only the needed row leaves HBM
                gi_sc.at[pl.ds(b, 1), :],
                sem.at[b])
        for b in range(bp):
            row_copy(b).start()
        for b in range(bp):
            row_copy(b).wait()

        gi = gi_sc[...]                                    # (Bp, 3Hp), already = x@W_ih^T + b_ih
        h = h0_ref[...]                                    # (Bp, Hp) f32
        gh = jnp.dot(h.astype(jnp.bfloat16), whh_ref[...],
                     preferred_element_type=jnp.float32) + bhh_ref[...]

        # PyTorch gate order r, z, n; slices are lane-aligned (hp is a multiple of 128).
        r = jax.nn.sigmoid(gi[:, 0:hp] + gh[:, 0:hp])
        z = jax.nn.sigmoid(gi[:, hp:2 * hp] + gh[:, hp:2 * hp])
        n = jnp.tanh(gi[:, 2 * hp:3 * hp] + r * gh[:, 2 * hp:3 * hp])
        h_sc[...] = (1.0 - z) * n + z * h

        m_sc[...] = jnp.full(m_sc.shape, _NEG, m_sc.dtype)
        l_sc[...] = jnp.zeros(l_sc.shape, l_sc.dtype)

    # ---------------- every step: one vocab tile of the output projection ----------------
    h_new = h_sc[...]
    logits = jnp.dot(h_new.astype(jnp.bfloat16), wout_ref[...],
                     preferred_element_type=jnp.float32) + bout_ref[...]     # (Bp, TV) f32
    logits_sc[j] = logits                                                    # leading-dim store

    m_prev = m_sc[...]
    m_new = jnp.maximum(m_prev, jnp.max(logits, axis=-1, keepdims=True))
    l_sc[...] = (l_sc[...] * jnp.exp(m_prev - m_new)
                 + jnp.sum(jnp.exp(logits - m_new), axis=-1, keepdims=True))
    m_sc[...] = m_new

    # ---------------- last step: normalize and emit lane-dense outputs ----------------
    @pl.when(j == nt - 1)
    def _finalize():
        lse = m_sc[...] + jnp.log(l_sc[...])                                 # (Bp, 1)
        for t in range(nt):                                                  # static, 128-aligned
            logp_ref[:, t * tv:(t + 1) * tv] = logits_sc[t] - lse
        hnew_ref[...] = h_sc[...]


def decoder_rnn_forward(input_ids, hidden, kp):
    """input_ids: (B,) int tokens. hidden: (1, B, H) f32.

    Returns (log-probs (B, V), new hidden (1, B, H)).
    """
    B = input_ids.shape[0]
    H, V, Hp, Vp, tv = kp["H"], kp["V"], kp["Hp"], kp["Vp"], kp["tile_v"]
    Bp = max(8, _round_up(B, 8))
    nt = Vp // tv

    idx = jnp.zeros((Bp,), jnp.int32).at[:B].set(input_ids.astype(jnp.int32))
    h0 = jnp.zeros((Bp, Hp), jnp.float32).at[:B, :H].set(hidden[0])

    kernel = functools.partial(_decoder_kernel, hp=Hp, tv=tv, nt=nt, bp=Bp)

    grid_spec = pltpu.PrefetchScalarGridSpec(
        num_scalar_prefetch=1,                         # token indices -> SMEM
        grid=(nt,),                                    # vocab tiles of the output projection
        in_specs=[
            pl.BlockSpec(memory_space=pl.ANY),                    # emb_gi table stays in HBM
            pl.BlockSpec((Bp, Hp), lambda j, s: (0, 0)),          # h0
            pl.BlockSpec((Hp, 3 * Hp), lambda j, s: (0, 0)),      # W_hh^T (bf16)
            pl.BlockSpec((1, 3 * Hp), lambda j, s: (0, 0)),       # b_hh
            pl.BlockSpec((Hp, tv), lambda j, s: (0, j)),          # W_out^T tile (bf16, streamed)
            pl.BlockSpec((1, tv), lambda j, s: (0, j)),           # b_out tile
        ],
        out_specs=[
            pl.BlockSpec((Bp, Vp), lambda j, s: (0, 0)),          # log-probs (resident)
            pl.BlockSpec((Bp, Hp), lambda j, s: (0, 0)),          # new hidden (resident)
        ],
        scratch_shapes=[
            pltpu.VMEM((Bp, 3 * Hp), jnp.float32),                # gathered gi rows
            pltpu.VMEM((Bp, Hp), jnp.float32),                    # h_new
            pltpu.VMEM((nt, Bp, tv), jnp.float32),                # raw logit tiles
            pltpu.VMEM((Bp, 1), jnp.float32),                     # running max
            pltpu.VMEM((Bp, 1), jnp.float32),                     # running sum
            pltpu.SemaphoreType.DMA((Bp,)),                       # gather semaphores
        ],
    )

    logp_pad, h_new_pad = pl.pallas_call(
        kernel,
        grid_spec=grid_spec,
        out_shape=(jax.ShapeDtypeStruct((Bp, Vp), jnp.float32),
                   jax.ShapeDtypeStruct((Bp, Hp), jnp.float32)),
        compiler_params=pltpu.CompilerParams(
            dimension_semantics=("arbitrary",),        # softmax stats carried across V tiles
            vmem_limit_bytes=48 * 1024 * 1024),
    )(idx, kp["emb_gi"], h0, kp["w_hh_t"], kp["b_hh"], kp["w_out_t"], kp["b_out"])

    return logp_pad[:B, :V], h_new_pad[:B, :H][None, :, :]


def init_params(key, hidden_size, output_size):
    """Deterministic synthetic parameters matching nn.Embedding / nn.GRU / nn.Linear."""
    H, V = hidden_size, output_size
    ks = jax.random.split(key, 7)
    s = 1.0 / jnp.sqrt(H)
    return {
        "emb": jax.random.normal(ks[0], (V, H), jnp.float32),                 # Embedding(V, H)
        "w_ih": jax.random.uniform(ks[1], (3 * H, H), jnp.float32, -s, s),    # GRU weight_ih_l0
        "w_hh": jax.random.uniform(ks[2], (3 * H, H), jnp.float32, -s, s),    # GRU weight_hh_l0
        "b_ih": jax.random.uniform(ks[3], (3 * H,), jnp.float32, -s, s),
        "b_hh": jax.random.uniform(ks[4], (3 * H,), jnp.float32, -s, s),
        "w_out": jax.random.uniform(ks[5], (V, H), jnp.float32, -s, s),       # Linear(H, V)
        "b_out": jax.random.uniform(ks[6], (V,), jnp.float32, -s, s),
    }


def prepare_params(raw, hidden_size, output_size, tile_v=128):
    """Fold emb@W_ih+b_ih, pad to lane/sublane-aligned layouts, cast streamed weights to bf16."""
    assert tile_v % 128 == 0
    H, V = hidden_size, output_size
    Hp = _round_up(H, 128)
    Vp = _round_up(V, tile_v)
    f32 = jnp.float32

    def pad_gate_cols(a):
        """(..., 3H) -> (..., 3*Hp): each gate block [r|z|n] padded H -> Hp (zeros)."""
        a = a.astype(f32)
        out = jnp.zeros(a.shape[:-1] + (3 * Hp,), f32)
        for g in range(3):
            out = out.at[..., g * Hp:g * Hp + H].set(a[..., g * H:(g + 1) * H])
        return out

    # Folded input projection: gi[v] = emb[v] @ W_ih^T + b_ih   (exact algebra, kept f32 —
    # only B rows/step are gathered so there is no bandwidth win from bf16 here).
    emb_gi = raw["emb"] @ raw["w_ih"].T + raw["b_ih"][None, :]                # (V, 3H)
    emb_gi_p = jnp.zeros((Vp, 3 * Hp), f32).at[:V].set(pad_gate_cols(emb_gi))

    w_hh_t_p = jnp.zeros((Hp, 3 * Hp), f32).at[:H].set(pad_gate_cols(raw["w_hh"].T))
    b_hh_p = pad_gate_cols(raw["b_hh"])[None, :]                              # (1, 3*Hp)

    w_out_t_p = jnp.zeros((Hp, Vp), f32).at[:H, :V].set(raw["w_out"].T)
    b_out_p = jnp.full((1, Vp), _NEG, f32).at[0, :V].set(raw["b_out"])        # pad vocab -> -inf

    return {
        "emb_gi": emb_gi_p,                           # f32 (Vp, 3Hp), gathered from HBM
        "w_hh_t": w_hh_t_p.astype(jnp.bfloat16),      # bf16, VMEM-resident
        "b_hh": b_hh_p,
        "w_out_t": w_out_t_p.astype(jnp.bfloat16),    # bf16, streamed in vocab tiles
        "b_out": b_out_p,
        "H": H, "V": V, "Hp": Hp, "Vp": Vp, "tile_v": tile_v,
    }


def _reference_forward(input_ids, hidden, raw):
    """Pure-JAX reference of the PyTorch forward, mirroring the kernel's bf16 weight rounding."""
    H = hidden.shape[-1]
    bf = lambda a: a.astype(jnp.bfloat16).astype(jnp.float32)
    x = raw["emb"][input_ids]                                     # (B, H)
    h = hidden[0]
    gi = x @ raw["w_ih"].T + raw["b_ih"][None, :]
    gh = bf(h) @ bf(raw["w_hh"].T) + raw["b_hh"][None, :]
    r = jax.nn.sigmoid(gi[:, :H] + gh[:, :H])
    z = jax.nn.sigmoid(gi[:, H:2 * H] + gh[:, H:2 * H])
    n = jnp.tanh(gi[:, 2 * H:] + r * gh[:, 2 * H:])
    h_new = (1.0 - z) * n + z * h
    logits = bf(h_new) @ bf(raw["w_out"].T) + raw["b_out"][None, :]
    return jax.nn.log_softmax(logits, axis=-1), h_new[None]


if __name__ == "__main__":
    B, H, V = 2, 32, 300          # batch, hidden_size, output_size (vocab)
    key = jax.random.PRNGKey(0)
    k_param, k_hid, k_tok = jax.random.split(key, 3)

    raw = init_params(k_param, H, V)
    kp = prepare_params(raw, H, V, tile_v=128)        # Vp=384 -> 3 vocab tiles on the grid

    hidden = jax.random.normal(k_hid, (1, B, H), jnp.float32)     # (n_layers=1, B, H)
    input_ids = jax.random.randint(k_tok, (B,), 0, V, dtype=jnp.int32)

    step = jax.jit(lambda ids, h: decoder_rnn_forward(ids, h, kp))
    logp, new_hidden = step(input_ids, hidden)
    jax.block_until_ready((logp, new_hidden))

    ref_logp, ref_hidden = _reference_forward(input_ids, hidden, raw)
    assert logp.shape == (B, V) and new_hidden.shape == (1, B, H)
    assert jnp.allclose(logp, ref_logp, atol=2e-2, rtol=2e-2)
    assert jnp.allclose(new_hidden, ref_hidden, atol=2e-2, rtol=2e-2)
    # log-softmax rows must normalize
    assert jnp.allclose(jnp.sum(jnp.exp(logp), axis=-1), 1.0, atol=1e-3)

    print("KERNEL_OK")
</pallas_src>

<mosaic_0001>
module attributes {stable_mosaic.version = 11 : i64} {
  func.func @_decoder_kernel(%arg0: i32, %arg1: memref<8xi32, #tpu.memory_space<smem>>, %arg2: memref<384x384xf32, #tpu.memory_space<any>>, %arg3: memref<8x128xf32, #tpu.memory_space<vmem>>, %arg4: memref<128x384xbf16, #tpu.memory_space<vmem>>, %arg5: memref<1x384xf32, #tpu.memory_space<vmem>>, %arg6: memref<128x128xbf16, #tpu.memory_space<vmem>>, %arg7: memref<1x128xf32, #tpu.memory_space<vmem>>, %arg8: memref<8x384xf32, #tpu.memory_space<vmem>>, %arg9: memref<8x128xf32, #tpu.memory_space<vmem>>, %arg10: memref<8x384xf32, #tpu.memory_space<vmem>>, %arg11: memref<8x128xf32, #tpu.memory_space<vmem>>, %arg12: memref<3x8x128xf32, #tpu.memory_space<vmem>>, %arg13: memref<8x1xf32, #tpu.memory_space<vmem>>, %arg14: memref<8x1xf32, #tpu.memory_space<vmem>>, %arg15: memref<8x!tpu.dma_semaphore, #tpu.memory_space<semaphore_mem>>) attributes {dimension_semantics = [#tpu.dimension_semantics<arbitrary>], iteration_bounds = array<i64: 3>, scalar_prefetch = 1 : i64, scratch_operands = 6 : i64, tpu.core_type = #tpu.core_type<tc>, window_params = [{}, {pipeline_mode = #tpu.pipeline_mode<synchronous>, transform_indices = @transform_1, window_bounds = array<i64: 8, 128>}, {pipeline_mode = #tpu.pipeline_mode<synchronous>, transform_indices = @transform_2, window_bounds = array<i64: 128, 384>}, {pipeline_mode = #tpu.pipeline_mode<synchronous>, transform_indices = @transform_3, window_bounds = array<i64: 1, 384>}, {transform_indices = @transform_4, window_bounds = array<i64: 128, 128>}, {transform_indices = @transform_5, window_bounds = array<i64: 1, 128>}, {pipeline_mode = #tpu.pipeline_mode<synchronous>, transform_indices = @transform_6, window_bounds = array<i64: 8, 384>}, {pipeline_mode = #tpu.pipeline_mode<synchronous>, transform_indices = @transform_7, window_bounds = array<i64: 8, 128>}]} {
    %c0_i32 = arith.constant 0 : i32
    %0 = arith.cmpi eq, %arg0, %c0_i32 : i32
    %1 = arith.extui %0 : i1 to i32
    %c0_i32_0 = arith.constant 0 : i32
    %2 = arith.cmpi ne, %1, %c0_i32_0 : i32
    scf.if %2 {
      %c0_19 = arith.constant 0 : index
      %33 = memref.load %arg1[%c0_19] : memref<8xi32, #tpu.memory_space<smem>>
      %c0_i32_20 = arith.constant 0 : i32
      %c0_i32_21 = arith.constant 0 : i32
      %34 = tpu.memref_slice %arg2[%33, %c0_i32_21] : memref<384x384xf32, #tpu.memory_space<any>> -> memref<1x384xf32, #tpu.memory_space<any>>
      %c0_i32_22 = arith.constant 0 : i32
      %c0_i32_23 = arith.constant 0 : i32
      %35 = tpu.memref_slice %arg10[%c0_i32_22, %c0_i32_23] : memref<8x384xf32, #tpu.memory_space<vmem>> -> memref<1x384xf32, #tpu.memory_space<vmem>>
      %36 = tpu.memref_slice %arg15[%c0_i32_20] : memref<8x!tpu.dma_semaphore, #tpu.memory_space<semaphore_mem>> -> memref<1x!tpu.dma_semaphore, #tpu.memory_space<semaphore_mem>>
      %37 = tpu.memref_squeeze %36 : memref<1x!tpu.dma_semaphore, #tpu.memory_space<semaphore_mem>> -> memref<!tpu.dma_semaphore, #tpu.memory_space<semaphore_mem>>
      tpu.enqueue_dma source(%34 : memref<1x384xf32, #tpu.memory_space<any>>) target(%35 : memref<1x384xf32, #tpu.memory_space<vmem>>) target_semaphore(%37 : memref<!tpu.dma_semaphore, #tpu.memory_space<semaphore_mem>>)
      %c1 = arith.constant 1 : index
      %38 = memref.load %arg1[%c1] : memref<8xi32, #tpu.memory_space<smem>>
      %c1_i32 = arith.constant 1 : i32
      %c0_i32_24 = arith.constant 0 : i32
      %39 = tpu.memref_slice %arg2[%38, %c0_i32_24] : memref<384x384xf32, #tpu.memory_space<any>> -> memref<1x384xf32, #tpu.memory_space<any>>
      %c1_i32_25 = arith.constant 1 : i32
      %c0_i32_26 = arith.constant 0 : i32
      %40 = tpu.memref_slice %arg10[%c1_i32_25, %c0_i32_26] : memref<8x384xf32, #tpu.memory_space<vmem>> -> memref<1x384xf32, #tpu.memory_space<vmem>>
      %41 = tpu.memref_slice %arg15[%c1_i32] : memref<8x!tpu.dma_semaphore, #tpu.memory_space<semaphore_mem>> -> memref<1x!tpu.dma_semaphore, #tpu.memory_space<semaphore_mem>>
      %42 = tpu.memref_squeeze %41 : memref<1x!tpu.dma_semaphore, #tpu.memory_space<semaphore_mem>> -> memref<!tpu.dma_semaphore, #tpu.memory_space<semaphore_mem>>
      tpu.enqueue_dma source(%39 : memref<1x384xf32, #tpu.memory_space<any>>) target(%40 : memref<1x384xf32, #tpu.memory_space<vmem>>) target_semaphore(%42 : memref<!tpu.dma_semaphore, #tpu.memory_space<semaphore_mem>>)
      %c2 = arith.constant 2 : index
      %43 = memref.load %arg1[%c2] : memref<8xi32, #tpu.memory_space<smem>>
      %c2_i32_27 = arith.constant 2 : i32
      %c0_i32_28 = arith.constant 0 : i32
      %44 = tpu.memref_slice %arg2[%43, %c0_i32_28] : memref<384x384xf32, #tpu.memory_space<any>> -> memref<1x384xf32, #tpu.memory_space<any>>
      %c2_i32_29 = arith.constant 2 : i32
      %c0_i32_30 = arith.constant 0 : i32
      %45 = tpu.memref_slice %arg10[%c2_i32_29, %c0_i32_30] : memref<8x384xf32, #tpu.memory_space<vmem>> -> memref<1x384xf32, #tpu.memory_space<vmem>>
      %46 = tpu.memref_slice %arg15[%c2_i32_27] : memref<8x!tpu.dma_semaphore, #tpu.memory_space<semaphore_mem>> -> memref<1x!tpu.dma_semaphore, #tpu.memory_space<semaphore_mem>>
      %47 = tpu.memref_squeeze %46 : memref<1x!tpu.dma_semaphore, #tpu.memory_space<semaphore_mem>> -> memref<!tpu.dma_semaphore, #tpu.memory_space<semaphore_mem>>
      tpu.enqueue_dma source(%44 : memref<1x384xf32, #tpu.memory_space<any>>) target(%45 : memref<1x384xf32, #tpu.memory_space<vmem>>) target_semaphore(%47 : memref<!tpu.dma_semaphore, #tpu.memory_space<semaphore_mem>>)
      %c3 = arith.constant 3 : index
      %48 = memref.load %arg1[%c3] : memref<8xi32, #tpu.memory_space<smem>>
      %c3_i32 = arith.constant 3 : i32
      %c0_i32_31 = arith.constant 0 : i32
      %49 = tpu.memref_slice %arg2[%48, %c0_i32_31] : memref<384x384xf32, #tpu.memory_space<any>> -> memref<1x384xf32, #tpu.memory_space<any>>
      %c3_i32_32 = arith.constant 3 : i32
      %c0_i32_33 = arith.constant 0 : i32
      %50 = tpu.memref_slice %arg10[%c3_i32_32, %c0_i32_33] : memref<8x384xf32, #tpu.memory_space<vmem>> -> memref<1x384xf32, #tpu.memory_space<vmem>>
      %51 = tpu.memref_slice %arg15[%c3_i32] : memref<8x!tpu.dma_semaphore, #tpu.memory_space<semaphore_mem>> -> memref<1x!tpu.dma_semaphore, #tpu.memory_space<semaphore_mem>>
      %52 = tpu.memref_squeeze %51 : memref<1x!tpu.dma_semaphore, #tpu.memory_space<semaphore_mem>> -> memref<!tpu.dma_semaphore, #tpu.memory_space<semaphore_mem>>
      tpu.enqueue_dma source(%49 : memref<1x384xf32, #tpu.memory_space<any>>) target(%50 : memref<1x384xf32, #tpu.memory_space<vmem>>) target_semaphore(%52 : memref<!tpu.dma_semaphore, #tpu.memory_space<semaphore_mem>>)
      %c4 = arith.constant 4 : index
      %53 = memref.load %arg1[%c4] : memref<8xi32, #tpu.memory_space<smem>>
      %c4_i32 = arith.constant 4 : i32
      %c0_i32_34 = arith.constant 0 : i32
      %54 = tpu.memref_slice %arg2[%53, %c0_i32_34] : memref<384x384xf32, #tpu.memory_space<any>> -> memref<1x384xf32, #tpu.memory_space<any>>
      %c4_i32_35 = arith.constant 4 : i32
      %c0_i32_36 = arith.constant 0 : i32
      %55 = tpu.memref_slice %arg10[%c4_i32_35, %c0_i32_36] : memref<8x384xf32, #tpu.memory_space<vmem>> -> memref<1x384xf32, #tpu.memory_space<vmem>>
      %56 = tpu.memref_slice %arg15[%c4_i32] : memref<8x!tpu.dma_semaphore, #tpu.memory_space<semaphore_mem>> -> memref<1x!tpu.dma_semaphore, #tpu.memory_space<semaphore_mem>>
      %57 = tpu.memref_squeeze %56 : memref<1x!tpu.dma_semaphore, #tpu.memory_space<semaphore_mem>> -> memref<!tpu.dma_semaphore, #tpu.memory_space<semaphore_mem>>
      tpu.enqueue_dma source(%54 : memref<1x384xf32, #tpu.memory_space<any>>) target(%55 : memref<1x384xf32, #tpu.memory_space<vmem>>) target_semaphore(%57 : memref<!tpu.dma_semaphore, #tpu.memory_space<semaphore_mem>>)
      %c5 = arith.constant 5 : index
      %58 = memref.load %arg1[%c5] : memref<8xi32, #tpu.memory_space<smem>>
      %c5_i32 = arith.constant 5 : i32
      %c0_i32_37 = arith.constant 0 : i32
      %59 = tpu.memref_slice %arg2[%58, %c0_i32_37] : memref<384x384xf32, #tpu.memory_space<any>> -> memref<1x384xf32, #tpu.memory_space<any>>
      %c5_i32_38 = arith.constant 5 : i32
      %c0_i32_39 = arith.constant 0 : i32
      %60 = tpu.memref_slice %arg10[%c5_i32_38, %c0_i32_39] : memref<8x384xf32, #tpu.memory_space<vmem>> -> memref<1x384xf32, #tpu.memory_space<vmem>>
      %61 = tpu.memref_slice %arg15[%c5_i32] : memref<8x!tpu.dma_semaphore, #tpu.memory_space<semaphore_mem>> -> memref<1x!tpu.dma_semaphore, #tpu.memory_space<semaphore_mem>>
      %62 = tpu.memref_squeeze %61 : memref<1x!tpu.dma_semaphore, #tpu.memory_space<semaphore_mem>> -> memref<!tpu.dma_semaphore, #tpu.memory_space<semaphore_mem>>
      tpu.enqueue_dma source(%59 : memref<1x384xf32, #tpu.memory_space<any>>) target(%60 : memref<1x384xf32, #tpu.memory_space<vmem>>) target_semaphore(%62 : memref<!tpu.dma_semaphore, #tpu.memory_space<semaphore_mem>>)
      %c6 = arith.constant 6 : index
      %63 = memref.load %arg1[%c6] : memref<8xi32, #tpu.memory_space<smem>>
      %c6_i32 = arith.constant 6 : i32
      %c0_i32_40 = arith.constant 0 : i32
      %64 = tpu.memref_slice %arg2[%63, %c0_i32_40] : memref<384x384xf32, #tpu.memory_space<any>> -> memref<1x384xf32, #tpu.memory_space<any>>
      %c6_i32_41 = arith.constant 6 : i32
      %c0_i32_42 = arith.constant 0 : i32
      %65 = tpu.memref_slice %arg10[%c6_i32_41, %c0_i32_42] : memref<8x384xf32, #tpu.memory_space<vmem>> -> memref<1x384xf32, #tpu.memory_space<vmem>>
      %66 = tpu.memref_slice %arg15[%c6_i32] : memref<8x!tpu.dma_semaphore, #tpu.memory_space<semaphore_mem>> -> memref<1x!tpu.dma_semaphore, #tpu.memory_space<semaphore_mem>>
      %67 = tpu.memref_squeeze %66 : memref<1x!tpu.dma_semaphore, #tpu.memory_space<semaphore_mem>> -> memref<!tpu.dma_semaphore, #tpu.memory_space<semaphore_mem>>
      tpu.enqueue_dma source(%64 : memref<1x384xf32, #tpu.memory_space<any>>) target(%65 : memref<1x384xf32, #tpu.memory_space<vmem>>) target_semaphore(%67 : memref<!tpu.dma_semaphore, #tpu.memory_space<semaphore_mem>>)
      %c7 = arith.constant 7 : index
      %68 = memref.load %arg1[%c7] : memref<8xi32, #tpu.memory_space<smem>>
      %c7_i32 = arith.constant 7 : i32
      %c0_i32_43 = arith.constant 0 : i32
      %69 = tpu.memref_slice %arg2[%68, %c0_i32_43] : memref<384x384xf32, #tpu.memory_space<any>> -> memref<1x384xf32, #tpu.memory_space<any>>
      %c7_i32_44 = arith.constant 7 : i32
      %c0_i32_45 = arith.constant 0 : i32
      %70 = tpu.memref_slice %arg10[%c7_i32_44, %c0_i32_45] : memref<8x384xf32, #tpu.memory_space<vmem>> -> memref<1x384xf32, #tpu.memory_space<vmem>>
      %71 = tpu.memref_slice %arg15[%c7_i32] : memref<8x!tpu.dma_semaphore, #tpu.memory_space<semaphore_mem>> -> memref<1x!tpu.dma_semaphore, #tpu.memory_space<semaphore_mem>>
      %72 = tpu.memref_squeeze %71 : memref<1x!tpu.dma_semaphore, #tpu.memory_space<semaphore_mem>> -> memref<!tpu.dma_semaphore, #tpu.memory_space<semaphore_mem>>
      tpu.enqueue_dma source(%69 : memref<1x384xf32, #tpu.memory_space<any>>) target(%70 : memref<1x384xf32, #tpu.memory_space<vmem>>) target_semaphore(%72 : memref<!tpu.dma_semaphore, #tpu.memory_space<semaphore_mem>>)
      %c0_46 = arith.constant 0 : index
      %73 = memref.load %arg1[%c0_46] : memref<8xi32, #tpu.memory_space<smem>>
      %c0_i32_47 = arith.constant 0 : i32
      %c0_i32_48 = arith.constant 0 : i32
      %74 = tpu.memref_slice %arg2[%73, %c0_i32_48] : memref<384x384xf32, #tpu.memory_space<any>> -> memref<1x384xf32, #tpu.memory_space<any>>
      %c0_i32_49 = arith.constant 0 : i32
      %c0_i32_50 = arith.constant 0 : i32
      %75 = tpu.memref_slice %arg10[%c0_i32_49, %c0_i32_50] : memref<8x384xf32, #tpu.memory_space<vmem>> -> memref<1x384xf32, #tpu.memory_space<vmem>>
      %76 = tpu.memref_slice %arg15[%c0_i32_47] : memref<8x!tpu.dma_semaphore, #tpu.memory_space<semaphore_mem>> -> memref<1x!tpu.dma_semaphore, #tpu.memory_space<semaphore_mem>>
      %77 = tpu.memref_squeeze %76 : memref<1x!tpu.dma_semaphore, #tpu.memory_space<semaphore_mem>> -> memref<!tpu.dma_semaphore, #tpu.memory_space<semaphore_mem>>
      tpu.wait_dma2 semaphore(%77 : memref<!tpu.dma_semaphore, #tpu.memory_space<semaphore_mem>>) src(%74 : memref<1x384xf32, #tpu.memory_space<any>>) dst(%75 : memref<1x384xf32, #tpu.memory_space<vmem>>)
      %c1_51 = arith.constant 1 : index
      %78 = memref.load %arg1[%c1_51] : memref<8xi32, #tpu.memory_space<smem>>
      %c1_i32_52 = arith.constant 1 : i32
      %c0_i32_53 = arith.constant 0 : i32
      %79 = tpu.memref_slice %arg2[%78, %c0_i32_53] : memref<384x384xf32, #tpu.memory_space<any>> -> memref<1x384xf32, #tpu.memory_space<any>>
      %c1_i32_54 = arith.constant 1 : i32
      %c0_i32_55 = arith.constant 0 : i32
      %80 = tpu.memref_slice %arg10[%c1_i32_54, %c0_i32_55] : memref<8x384xf32, #tpu.memory_space<vmem>> -> memref<1x384xf32, #tpu.memory_space<vmem>>
      %81 = tpu.memref_slice %arg15[%c1_i32_52] : memref<8x!tpu.dma_semaphore, #tpu.memory_space<semaphore_mem>> -> memref<1x!tpu.dma_semaphore, #tpu.memory_space<semaphore_mem>>
      %82 = tpu.memref_squeeze %81 : memref<1x!tpu.dma_semaphore, #tpu.memory_space<semaphore_mem>> -> memref<!tpu.dma_semaphore, #tpu.memory_space<semaphore_mem>>
      tpu.wait_dma2 semaphore(%82 : memref<!tpu.dma_semaphore, #tpu.memory_space<semaphore_mem>>) src(%79 : memref<1x384xf32, #tpu.memory_space<any>>) dst(%80 : memref<1x384xf32, #tpu.memory_space<vmem>>)
      %c2_56 = arith.constant 2 : index
      %83 = memref.load %arg1[%c2_56] : memref<8xi32, #tpu.memory_space<smem>>
      %c2_i32_57 = arith.constant 2 : i32
      %c0_i32_58 = arith.constant 0 : i32
      %84 = tpu.memref_slice %arg2[%83, %c0_i32_58] : memref<384x384xf32, #tpu.memory_space<any>> -> memref<1x384xf32, #tpu.memory_space<any>>
      %c2_i32_59 = arith.constant 2 : i32
      %c0_i32_60 = arith.constant 0 : i32
      %85 = tpu.memref_slice %arg10[%c2_i32_59, %c0_i32_60] : memref<8x384xf32, #tpu.memory_space<vmem>> -> memref<1x384xf32, #tpu.memory_space<vmem>>
      %86 = tpu.memref_slice %arg15[%c2_i32_57] : memref<8x!tpu.dma_semaphore, #tpu.memory_space<semaphore_mem>> -> memref<1x!tpu.dma_semaphore, #tpu.memory_space<semaphore_mem>>
      %87 = tpu.memref_squeeze %86 : memref<1x!tpu.dma_semaphore, #tpu.memory_space<semaphore_mem>> -> memref<!tpu.dma_semaphore, #tpu.memory_space<semaphore_mem>>
      tpu.wait_dma2 semaphore(%87 : memref<!tpu.dma_semaphore, #tpu.memory_space<semaphore_mem>>) src(%84 : memref<1x384xf32, #tpu.memory_space<any>>) dst(%85 : memref<1x384xf32, #tpu.memory_space<vmem>>)
      %c3_61 = arith.constant 3 : index
      %88 = memref.load %arg1[%c3_61] : memref<8xi32, #tpu.memory_space<smem>>
      %c3_i32_62 = arith.constant 3 : i32
      %c0_i32_63 = arith.constant 0 : i32
      %89 = tpu.memref_slice %arg2[%88, %c0_i32_63] : memref<384x384xf32, #tpu.memory_space<any>> -> memref<1x384xf32, #tpu.memory_space<any>>
      %c3_i32_64 = arith.constant 3 : i32
      %c0_i32_65 = arith.constant 0 : i32
      %90 = tpu.memref_slice %arg10[%c3_i32_64, %c0_i32_65] : memref<8x384xf32, #tpu.memory_space<vmem>> -> memref<1x384xf32, #tpu.memory_space<vmem>>
      %91 = tpu.memref_slice %arg15[%c3_i32_62] : memref<8x!tpu.dma_semaphore, #tpu.memory_space<semaphore_mem>> -> memref<1x!tpu.dma_semaphore, #tpu.memory_space<semaphore_mem>>
      %92 = tpu.memref_squeeze %91 : memref<1x!tpu.dma_semaphore, #tpu.memory_space<semaphore_mem>> -> memref<!tpu.dma_semaphore, #tpu.memory_space<semaphore_mem>>
      tpu.wait_dma2 semaphore(%92 : memref<!tpu.dma_semaphore, #tpu.memory_space<semaphore_mem>>) src(%89 : memref<1x384xf32, #tpu.memory_space<any>>) dst(%90 : memref<1x384xf32, #tpu.memory_space<vmem>>)
      %c4_66 = arith.constant 4 : index
      %93 = memref.load %arg1[%c4_66] : memref<8xi32, #tpu.memory_space<smem>>
      %c4_i32_67 = arith.constant 4 : i32
      %c0_i32_68 = arith.constant 0 : i32
      %94 = tpu.memref_slice %arg2[%93, %c0_i32_68] : memref<384x384xf32, #tpu.memory_space<any>> -> memref<1x384xf32, #tpu.memory_space<any>>
      %c4_i32_69 = arith.constant 4 : i32
      %c0_i32_70 = arith.constant 0 : i32
      %95 = tpu.memref_slice %arg10[%c4_i32_69, %c0_i32_70] : memref<8x384xf32, #tpu.memory_space<vmem>> -> memref<1x384xf32, #tpu.memory_space<vmem>>
      %96 = tpu.memref_slice %arg15[%c4_i32_67] : memref<8x!tpu.dma_semaphore, #tpu.memory_space<semaphore_mem>> -> memref<1x!tpu.dma_semaphore, #tpu.memory_space<semaphore_mem>>
      %97 = tpu.memref_squeeze %96 : memref<1x!tpu.dma_semaphore, #tpu.memory_space<semaphore_mem>> -> memref<!tpu.dma_semaphore, #tpu.memory_space<semaphore_mem>>
      tpu.wait_dma2 semaphore(%97 : memref<!tpu.dma_semaphore, #tpu.memory_space<semaphore_mem>>) src(%94 : memref<1x384xf32, #tpu.memory_space<any>>) dst(%95 : memref<1x384xf32, #tpu.memory_space<vmem>>)
      %c5_71 = arith.constant 5 : index
      %98 = memref.load %arg1[%c5_71] : memref<8xi32, #tpu.memory_space<smem>>
      %c5_i32_72 = arith.constant 5 : i32
      %c0_i32_73 = arith.constant 0 : i32
      %99 = tpu.memref_slice %arg2[%98, %c0_i32_73] : memref<384x384xf32, #tpu.memory_space<any>> -> memref<1x384xf32, #tpu.memory_space<any>>
      %c5_i32_74 = arith.constant 5 : i32
      %c0_i32_75 = arith.constant 0 : i32
      %100 = tpu.memref_slice %arg10[%c5_i32_74, %c0_i32_75] : memref<8x384xf32, #tpu.memory_space<vmem>> -> memref<1x384xf32, #tpu.memory_space<vmem>>
      %101 = tpu.memref_slice %arg15[%c5_i32_72] : memref<8x!tpu.dma_semaphore, #tpu.memory_space<semaphore_mem>> -> memref<1x!tpu.dma_semaphore, #tpu.memory_space<semaphore_mem>>
      %102 = tpu.memref_squeeze %101 : memref<1x!tpu.dma_semaphore, #tpu.memory_space<semaphore_mem>> -> memref<!tpu.dma_semaphore, #tpu.memory_space<semaphore_mem>>
      tpu.wait_dma2 semaphore(%102 : memref<!tpu.dma_semaphore, #tpu.memory_space<semaphore_mem>>) src(%99 : memref<1x384xf32, #tpu.memory_space<any>>) dst(%100 : memref<1x384xf32, #tpu.memory_space<vmem>>)
      %c6_76 = arith.constant 6 : index
      %103 = memref.load %arg1[%c6_76] : memref<8xi32, #tpu.memory_space<smem>>
      %c6_i32_77 = arith.constant 6 : i32
      %c0_i32_78 = arith.constant 0 : i32
      %104 = tpu.memref_slice %arg2[%103, %c0_i32_78] : memref<384x384xf32, #tpu.memory_space<any>> -> memref<1x384xf32, #tpu.memory_space<any>>
      %c6_i32_79 = arith.constant 6 : i32
      %c0_i32_80 = arith.constant 0 : i32
      %105 = tpu.memref_slice %arg10[%c6_i32_79, %c0_i32_80] : memref<8x384xf32, #tpu.memory_space<vmem>> -> memref<1x384xf32, #tpu.memory_space<vmem>>
      %106 = tpu.memref_slice %arg15[%c6_i32_77] : memref<8x!tpu.dma_semaphore, #tpu.memory_space<semaphore_mem>> -> memref<1x!tpu.dma_semaphore, #tpu.memory_space<semaphore_mem>>
      %107 = tpu.memref_squeeze %106 : memref<1x!tpu.dma_semaphore, #tpu.memory_space<semaphore_mem>> -> memref<!tpu.dma_semaphore, #tpu.memory_space<semaphore_mem>>
      tpu.wait_dma2 semaphore(%107 : memref<!tpu.dma_semaphore, #tpu.memory_space<semaphore_mem>>) src(%104 : memref<1x384xf32, #tpu.memory_space<any>>) dst(%105 : memref<1x384xf32, #tpu.memory_space<vmem>>)
      %c7_81 = arith.constant 7 : index
      %108 = memref.load %arg1[%c7_81] : memref<8xi32, #tpu.memory_space<smem>>
      %c7_i32_82 = arith.constant 7 : i32
      %c0_i32_83 = arith.constant 0 : i32
      %109 = tpu.memref_slice %arg2[%108, %c0_i32_83] : memref<384x384xf32, #tpu.memory_space<any>> -> memref<1x384xf32, #tpu.memory_space<any>>
      %c7_i32_84 = arith.constant 7 : i32
      %c0_i32_85 = arith.constant 0 : i32
      %110 = tpu.memref_slice %arg10[%c7_i32_84, %c0_i32_85] : memref<8x384xf32, #tpu.memory_space<vmem>> -> memref<1x384xf32, #tpu.memory_space<vmem>>
      %111 = tpu.memref_slice %arg15[%c7_i32_82] : memref<8x!tpu.dma_semaphore, #tpu.memory_space<semaphore_mem>> -> memref<1x!tpu.dma_semaphore, #tpu.memory_space<semaphore_mem>>
      %112 = tpu.memref_squeeze %111 : memref<1x!tpu.dma_semaphore, #tpu.memory_space<semaphore_mem>> -> memref<!tpu.dma_semaphore, #tpu.memory_space<semaphore_mem>>
      tpu.wait_dma2 semaphore(%112 : memref<!tpu.dma_semaphore, #tpu.memory_space<semaphore_mem>>) src(%109 : memref<1x384xf32, #tpu.memory_space<any>>) dst(%110 : memref<1x384xf32, #tpu.memory_space<vmem>>)
      %c0_86 = arith.constant 0 : index
      %c0_87 = arith.constant 0 : index
      %113 = vector.load %arg10[%c0_86, %c0_87] : memref<8x384xf32, #tpu.memory_space<vmem>>, vector<8x384xf32>
      %c0_88 = arith.constant 0 : index
      %c0_89 = arith.constant 0 : index
      %114 = vector.load %arg3[%c0_88, %c0_89] : memref<8x128xf32, #tpu.memory_space<vmem>>, vector<8x128xf32>
      %115 = arith.truncf %114 : vector<8x128xf32> to vector<8x128xbf16>
      %c0_90 = arith.constant 0 : index
      %c0_91 = arith.constant 0 : index
      %116 = vector.load %arg4[%c0_90, %c0_91] : memref<128x384xbf16, #tpu.memory_space<vmem>>, vector<128x384xbf16>
      %cst_92 = arith.constant dense<0.000000e+00> : vector<8x384xf32>
      %117 = tpu.matmul %115, %116, %cst_92 {dimension_numbers = #tpu.dot_dimension_numbers<[1], [0], [0], [1], [0, 0, 1, 1], [], []>} : vector<8x128xbf16>, vector<128x384xbf16>, vector<8x384xf32> -> vector<8x384xf32>
      %c0_93 = arith.constant 0 : index
      %c0_94 = arith.constant 0 : index
      %118 = vector.load %arg5[%c0_93, %c0_94] : memref<1x384xf32, #tpu.memory_space<vmem>>, vector<1x384xf32>
      %119 = vector.broadcast %118 : vector<1x384xf32> to vector<8x384xf32>
      %120 = arith.addf %117, %119 : vector<8x384xf32>
      %121 = vector.extract_strided_slice %113 {offsets = [0, 0], sizes = [8, 128], strides = [1, 1]} : vector<8x384xf32> to vector<8x128xf32>
      %122 = vector.extract_strided_slice %120 {offsets = [0, 0], sizes = [8, 128], strides = [1, 1]} : vector<8x384xf32> to vector<8x128xf32>
      %123 = arith.addf %121, %122 : vector<8x128xf32>
      %124 = arith.negf %123 : vector<8x128xf32>
      %125 = math.exp %124 : vector<8x128xf32>
      %cst_95 = arith.constant 1.000000e+00 : f32
      %126 = vector.broadcast %cst_95 : f32 to vector<8x128xf32>
      %127 = arith.addf %126, %125 : vector<8x128xf32>
      %128 = arith.divf %126, %127 : vector<8x128xf32>
      %129 = vector.extract_strided_slice %113 {offsets = [0, 128], sizes = [8, 128], strides = [1, 1]} : vector<8x384xf32> to vector<8x128xf32>
      %130 = vector.extract_strided_slice %120 {offsets = [0, 128], sizes = [8, 128], strides = [1, 1]} : vector<8x384xf32> to vector<8x128xf32>
      %131 = arith.addf %129, %130 : vector<8x128xf32>
      %132 = arith.negf %131 : vector<8x128xf32>
      %133 = math.exp %132 : vector<8x128xf32>
      %cst_96 = arith.constant 1.000000e+00 : f32
      %134 = vector.broadcast %cst_96 : f32 to vector<8x128xf32>
      %135 = arith.addf %134, %133 : vector<8x128xf32>
      %136 = arith.divf %134, %135 : vector<8x128xf32>
      %137 = vector.extract_strided_slice %113 {offsets = [0, 256], sizes = [8, 128], strides = [1, 1]} : vector<8x384xf32> to vector<8x128xf32>
      %138 = vector.extract_strided_slice %120 {offsets = [0, 256], sizes = [8, 128], strides = [1, 1]} : vector<8x384xf32> to vector<8x128xf32>
      %139 = arith.mulf %128, %138 : vector<8x128xf32>
      %140 = arith.addf %137, %139 : vector<8x128xf32>
      %141 = math.tanh %140 : vector<8x128xf32>
      %cst_97 = arith.constant 1.000000e+00 : f32
      %142 = vector.broadcast %cst_97 : f32 to vector<8x128xf32>
      %143 = arith.subf %142, %136 : vector<8x128xf32>
      %144 = arith.mulf %143, %141 : vector<8x128xf32>
      %145 = arith.mulf %136, %114 : vector<8x128xf32>
      %146 = arith.addf %144, %145 : vector<8x128xf32>
      %c0_98 = arith.constant 0 : index
      %c0_99 = arith.constant 0 : index
      %147 = vector.load %arg11[%c0_98, %c0_99] : memref<8x128xf32, #tpu.memory_space<vmem>>, vector<8x128xf32>
      tpu.vector_store %arg11[%c0_98, %c0_99], %146 {strides = array<i32>} : memref<8x128xf32, #tpu.memory_space<vmem>>, vector<8x128xf32>,
      %cst_100 = arith.constant -1.000000e+30 : f32
      %148 = vector.broadcast %cst_100 : f32 to vector<8x1xf32>
      %c0_101 = arith.constant 0 : index
      %c0_102 = arith.constant 0 : index
      %149 = vector.load %arg13[%c0_101, %c0_102] : memref<8x1xf32, #tpu.memory_space<vmem>>, vector<8x1xf32>
      tpu.vector_store %arg13[%c0_101, %c0_102], %148 {strides = array<i32>} : memref<8x1xf32, #tpu.memory_space<vmem>>, vector<8x1xf32>,
      %cst_103 = arith.constant 0.000000e+00 : f32
      %150 = vector.broadcast %cst_103 : f32 to vector<8x1xf32>
      %c0_104 = arith.constant 0 : index
      %c0_105 = arith.constant 0 : index
      %151 = vector.load %arg14[%c0_104, %c0_105] : memref<8x1xf32, #tpu.memory_space<vmem>>, vector<8x1xf32>
      tpu.vector_store %arg14[%c0_104, %c0_105], %150 {strides = array<i32>} : memref<8x1xf32, #tpu.memory_space<vmem>>, vector<8x1xf32>,
    } else {
    }
    %c0 = arith.constant 0 : index
    %c0_1 = arith.constant 0 : index
    %3 = vector.load %arg11[%c0, %c0_1] : memref<8x128xf32, #tpu.memory_space<vmem>>, vector<8x128xf32>
    %4 = arith.truncf %3 : vector<8x128xf32> to vector<8x128xbf16>
    %c0_2 = arith.constant 0 : index
    %c0_3 = arith.constant 0 : index
    %5 = vector.load %arg6[%c0_2, %c0_3] : memref<128x128xbf16, #tpu.memory_space<vmem>>, vector<128x128xbf16>
    %cst = arith.constant dense<0.000000e+00> : vector<8x128xf32>
    %6 = tpu.matmul %4, %5, %cst {dimension_numbers = #tpu.dot_dimension_numbers<[1], [0], [0], [1], [0, 0, 1, 1], [], []>} : vector<8x128xbf16>, vector<128x128xbf16>, vector<8x128xf32> -> vector<8x128xf32>
    %c0_4 = arith.constant 0 : index
    %c0_5 = arith.constant 0 : index
    %7 = vector.load %arg7[%c0_4, %c0_5] : memref<1x128xf32, #tpu.memory_space<vmem>>, vector<1x128xf32>
    %8 = vector.broadcast %7 : vector<1x128xf32> to vector<8x128xf32>
    %9 = arith.addf %6, %8 : vector<8x128xf32>
    %10 = arith.index_cast %arg0 : i32 to index
    %c0_6 = arith.constant 0 : index
    %c0_7 = arith.constant 0 : index
    %11 = vector.load %arg12[%10, %c0_6, %c0_7] : memref<3x8x128xf32, #tpu.memory_space<vmem>>, vector<1x8x128xf32>
    %12 = vector.shape_cast %11 : vector<1x8x128xf32> to vector<8x128xf32>
    %13 = vector.shape_cast %9 : vector<8x128xf32> to vector<1x8x128xf32>
    tpu.vector_store %arg12[%10, %c0_6, %c0_7], %13 {strides = array<i32>} : memref<3x8x128xf32, #tpu.memory_space<vmem>>, vector<1x8x128xf32>,
    %c0_8 = arith.constant 0 : index
    %c0_9 = arith.constant 0 : index
    %14 = vector.load %arg13[%c0_8, %c0_9] : memref<8x1xf32, #tpu.memory_space<vmem>>, vector<8x1xf32>
    %cst_10 = arith.constant dense<0xFF800000> : vector<8xf32>
    %15 = vector.multi_reduction <maximumf>, %9, %cst_10 [1] : vector<8x128xf32> to vector<8xf32>
    %16 = vector.shape_cast %15 : vector<8xf32> to vector<8x1xf32>
    %17 = arith.maximumf %14, %16 : vector<8x1xf32>
    %c0_11 = arith.constant 0 : index
    %c0_12 = arith.constant 0 : index
    %18 = vector.load %arg14[%c0_11, %c0_12] : memref<8x1xf32, #tpu.memory_space<vmem>>, vector<8x1xf32>
    %19 = arith.subf %14, %17 : vector<8x1xf32>
    %20 = math.exp %19 : vector<8x1xf32>
    %21 = arith.mulf %18, %20 : vector<8x1xf32>
    %22 = vector.broadcast %17 : vector<8x1xf32> to vector<8x128xf32>
    %23 = arith.subf %9, %22 : vector<8x128xf32>
    %24 = math.exp %23 : vector<8x128xf32>
    %cst_13 = arith.constant dense<0.000000e+00> : vector<8xf32>
    %25 = vector.multi_reduction <add>, %24, %cst_13 [1] : vector<8x128xf32> to vector<8xf32>
    %26 = vector.shape_cast %25 : vector<8xf32> to vector<8x1xf32>
    %27 = arith.addf %21, %26 : vector<8x1xf32>
    %c0_14 = arith.constant 0 : index
    %c0_15 = arith.constant 0 : index
    %28 = vector.load %arg14[%c0_14, %c0_15] : memref<8x1xf32, #tpu.memory_space<vmem>>, vector<8x1xf32>
    tpu.vector_store %arg14[%c0_14, %c0_15], %27 {strides = array<i32>} : memref<8x1xf32, #tpu.memory_space<vmem>>, vector<8x1xf32>,
    %c0_16 = arith.constant 0 : index
    %c0_17 = arith.constant 0 : index
    %29 = vector.load %arg13[%c0_16, %c0_17] : memref<8x1xf32, #tpu.memory_space<vmem>>, vector<8x1xf32>
    tpu.vector_store %arg13[%c0_16, %c0_17], %17 {strides = array<i32>} : memref<8x1xf32, #tpu.memory_space<vmem>>, vector<8x1xf32>,
    %c2_i32 = arith.constant 2 : i32
    %30 = arith.cmpi eq, %arg0, %c2_i32 : i32
    %31 = arith.extui %30 : i1 to i32
    %c0_i32_18 = arith.constant 0 : i32
    %32 = arith.cmpi ne, %31, %c0_i32_18 : i32
    scf.if %32 {
      %c0_19 = arith.constant 0 : index
      %c0_20 = arith.constant 0 : index
      %33 = vector.load %arg13[%c0_19, %c0_20] : memref<8x1xf32, #tpu.memory_space<vmem>>, vector<8x1xf32>
      %c0_21 = arith.constant 0 : index
      %c0_22 = arith.constant 0 : index
      %34 = vector.load %arg14[%c0_21, %c0_22] : memref<8x1xf32, #tpu.memory_space<vmem>>, vector<8x1xf32>
      %35 = math.log %34 : vector<8x1xf32>
      %36 = arith.addf %33, %35 : vector<8x1xf32>
      %c0_23 = arith.constant 0 : index
      %c0_24 = arith.constant 0 : index
      %c0_25 = arith.constant 0 : index
      %37 = vector.load %arg12[%c0_23, %c0_24, %c0_25] : memref<3x8x128xf32, #tpu.memory_space<vmem>>, vector<1x8x128xf32>
      %38 = vector.shape_cast %37 : vector<1x8x128xf32> to vector<8x128xf32>
      %39 = vector.broadcast %36 : vector<8x1xf32> to vector<8x128xf32>
      %40 = arith.subf %38, %39 : vector<8x128xf32>
      %c0_26 = arith.constant 0 : index
      %c0_27 = arith.constant 0 : index
      %41 = vector.load %arg8[%c0_26, %c0_27] : memref<8x384xf32, #tpu.memory_space<vmem>>, vector<8x128xf32>
      tpu.vector_store %arg8[%c0_26, %c0_27], %40 {strides = array<i32>} : memref<8x384xf32, #tpu.memory_space<vmem>>, vector<8x128xf32>,
      %c1 = arith.constant 1 : index
      %c0_28 = arith.constant 0 : index
      %c0_29 = arith.constant 0 : index
      %42 = vector.load %arg12[%c1, %c0_28, %c0_29] : memref<3x8x128xf32, #tpu.memory_space<vmem>>, vector<1x8x128xf32>
      %43 = vector.shape_cast %42 : vector<1x8x128xf32> to vector<8x128xf32>
      %44 = vector.broadcast %36 : vector<8x1xf32> to vector<8x128xf32>
      %45 = arith.subf %43, %44 : vector<8x128xf32>
      %c0_30 = arith.constant 0 : index
      %c128 = arith.constant 128 : index
      %46 = vector.load %arg8[%c0_30, %c128] : memref<8x384xf32, #tpu.memory_space<vmem>>, vector<8x128xf32>
      tpu.vector_store %arg8[%c0_30, %c128], %45 {strides = array<i32>} : memref<8x384xf32, #tpu.memory_space<vmem>>, vector<8x128xf32>,
      %c2 = arith.constant 2 : index
      %c0_31 = arith.constant 0 : index
      %c0_32 = arith.constant 0 : index
      %47 = vector.load %arg12[%c2, %c0_31, %c0_32] : memref<3x8x128xf32, #tpu.memory_space<vmem>>, vector<1x8x128xf32>
      %48 = vector.shape_cast %47 : vector<1x8x128xf32> to vector<8x128xf32>
      %49 = vector.broadcast %36 : vector<8x1xf32> to vector<8x128xf32>
      %50 = arith.subf %48, %49 : vector<8x128xf32>
      %c0_33 = arith.constant 0 : index
      %c256 = arith.constant 256 : index
      %51 = vector.load %arg8[%c0_33, %c256] : memref<8x384xf32, #tpu.memory_space<vmem>>, vector<8x128xf32>
      tpu.vector_store %arg8[%c0_33, %c256], %50 {strides = array<i32>} : memref<8x384xf32, #tpu.memory_space<vmem>>, vector<8x128xf32>,
      %c0_34 = arith.constant 0 : index
      %c0_35 = arith.constant 0 : index
      %52 = vector.load %arg11[%c0_34, %c0_35] : memref<8x128xf32, #tpu.memory_space<vmem>>, vector<8x128xf32>
      %c0_36 = arith.constant 0 : index
      %c0_37 = arith.constant 0 : index
      %53 = vector.load %arg9[%c0_36, %c0_37] : memref<8x128xf32, #tpu.memory_space<vmem>>, vector<8x128xf32>
      tpu.vector_store %arg9[%c0_36, %c0_37], %52 {strides = array<i32>} : memref<8x128xf32, #tpu.memory_space<vmem>>, vector<8x128xf32>,
    } else {
    }
    return
  }
  func.func @transform_1(%arg0: i32, %arg1: memref<8xi32, #tpu.memory_space<smem>>) -> (i32, i32) {
    %c0_i32 = arith.constant 0 : i32
    %c0_i32_0 = arith.constant 0 : i32
    %c0_i32_1 = arith.constant 0 : i32
    return %c0_i32, %c0_i32_0 : i32, i32
  }
  func.func @transform_2(%arg0: i32, %arg1: memref<8xi32, #tpu.memory_space<smem>>) -> (i32, i32) {
    %c0_i32 = arith.constant 0 : i32
    %c0_i32_0 = arith.constant 0 : i32
    %c0_i32_1 = arith.constant 0 : i32
    return %c0_i32, %c0_i32_0 : i32, i32
  }
  func.func @transform_3(%arg0: i32, %arg1: memref<8xi32, #tpu.memory_space<smem>>) -> (i32, i32) {
    %c0_i32 = arith.constant 0 : i32
    %c0_i32_0 = arith.constant 0 : i32
    %c0_i32_1 = arith.constant 0 : i32
    return %c0_i32, %c0_i32_0 : i32, i32
  }
  func.func @transform_4(%arg0: i32, %arg1: memref<8xi32, #tpu.memory_space<smem>>) -> (i32, i32) {
    %c0_i32 = arith.constant 0 : i32
    %c0_i32_0 = arith.constant 0 : i32
    return %c0_i32, %arg0 : i32, i32
  }
  func.func @transform_5(%arg0: i32, %arg1: memref<8xi32, #tpu.memory_space<smem>>) -> (i32, i32) {
    %c0_i32 = arith.constant 0 : i32
    %c0_i32_0 = arith.constant 0 : i32
    return %c0_i32, %arg0 : i32, i32
  }
  func.func @transform_6(%arg0: i32, %arg1: memref<8xi32, #tpu.memory_space<smem>>) -> (i32, i32) {
    %c0_i32 = arith.constant 0 : i32
    %c0_i32_0 = arith.constant 0 : i32
    %c0_i32_1 = arith.constant 0 : i32
    return %c0_i32, %c0_i32_0 : i32, i32
  }
  func.func @transform_7(%arg0: i32, %arg1: memref<8xi32, #tpu.memory_space<smem>>) -> (i32, i32) {
    %c0_i32 = arith.constant 0 : i32
    %c0_i32_0 = arith.constant 0 : i32
    %c0_i32_1 = arith.constant 0 : i32
    return %c0_i32, %c0_i32_0 : i32, i32
  }
}

</mosaic_0001>

<llo_original>
// kernel: _lambda_.1
$region0: #{_lambda_.1}
  #allocation0 [shape = 'u32[]', space=smem, size = 0x4, offset = 0x4, fixed_abs, tag = 'smem constant byte address 0x4 - core index']
  #allocation1 [shape = 'u32[144,128]{1,0:T(1,128)}', space=vmem, size = 0x12000, scoped, tag = 'internal scratch']
  #allocation2 [shape = 'f32[8,384]{1,0:T(8,128)}', space=vmem, size = 0x3000, scoped, tag = 'scratch operand']
  #allocation3 [shape = 'f32[8,128]{1,0:T(8,128)}', space=vmem, size = 0x1000, scoped, tag = 'scratch operand']
  #allocation4 [shape = 'f32[3,8,128]{2,1,0:T(8,128)}', space=vmem, size = 0x3000, scoped, tag = 'scratch operand']
  #allocation5 [shape = 'f32[8,1]{1,0:T(8,128)}', space=vmem, size = 0x1000, scoped, tag = 'scratch operand']
  #allocation6 [shape = 'f32[8,1]{1,0:T(8,128)}', space=vmem, size = 0x1000, scoped, tag = 'scratch operand']
  #allocation7 [shape = 's32[8]{0}', space=sflag, size = 0x20, scoped, tag = 'scratch operand']
  #allocation8 [shape = 's32[1]{0}', space=sflag, size = 0x4, scoped, tag = 'scoped memory for _lambda_.1']
  #allocation9 [shape = 'u8[512]{0}', space=smem, size = 0x200, scoped, tag = 'prefetched SMEM operand 0']
  #allocation14 [shape = 's32[]', space=sflag, size = 0x4, offset = 0, fixed_abs, tag = 'sflag constant byte address 0x0 - dummy sync flag']
  #allocation15 [shape = 's32[]', space=sflag, size = 0x4, offset = 0, fixed_abs, tag = 'sflag constant byte address 0x0 - dummy sync flag']
  #allocation16 [shape = 's32[]', space=sflag, size = 0x4, offset = 0, fixed_abs, tag = 'sflag constant byte address 0x0 - dummy sync flag']
  #allocation17 [shape = 's32[]', space=sflag, size = 0x4, offset = 0, fixed_abs, tag = 'sflag constant byte address 0x0 - dummy sync flag']
  #allocation18 [shape = 's32[]', space=sflag, size = 0x4, offset = 0, fixed_abs, tag = 'sflag constant byte address 0x0 - dummy sync flag']
  #allocation19 [shape = 's32[]', space=sflag, size = 0x4, offset = 0, fixed_abs, tag = 'sflag constant byte address 0x0 - dummy sync flag']
  #allocation20 [shape = 's32[]', space=sflag, size = 0x4, offset = 0, fixed_abs, tag = 'sflag constant byte address 0x0 - dummy sync flag']
  #allocation21 [shape = 's32[]', space=sflag, size = 0x4, offset = 0, fixed_abs, tag = 'sflag constant byte address 0x0 - dummy sync flag']
  %s0 = inlined_call_operand.vmem [shape: s32[8], index: 0, kind: input, shape index: {}]
  %s1 = inlined_call_operand.hbm [shape: f32[384,384], index: 1, kind: input, shape index: {}]
  %s2 = inlined_call_operand.vmem [shape: f32[8,128], index: 2, kind: input, shape index: {}]
  %s3 = inlined_call_operand.hbm [shape: bf16[128,384], index: 3, kind: input, shape index: {}]
  %s4 = inlined_call_operand.vmem [shape: f32[1,384], index: 4, kind: input, shape index: {}]
  %s5 = inlined_call_operand.hbm [shape: bf16[128,384], index: 5, kind: input, shape index: {}]
  %s6 = inlined_call_operand.vmem [shape: f32[1,384], index: 6, kind: input, shape index: {}]
  %s7 = inlined_call_operand.vmem [shape: f32[8,384], index: 7, kind: output, shape index: {0}]
  %s8 = inlined_call_operand.vmem [shape: f32[8,128], index: 8, kind: output, shape index: {1}]
  %9 = xla_tuple %s7, %s8
  %s10 = sld [smem:[#allocation0]]
  $region77: #{_lambda_.1} parent=0
    _
  %s12 = ssub.s32 1, %s10
  %s13 = scalar_select 0, %s12, %s10
  %s14 = sshll.u32 %s0, 4
  %s15 = int_to_ptr.vmem [resolvable:$true] %s14
  %17 = dma.vmem_to_smem %s15, 16, [#allocation9], [#allocation8]
  %18 = dma.done [#allocation8], 16
  %19 = sfence
  $region1: #{_lambda_.1} parent=0
    #allocation10 [shape = 'u8[98304]{0}', space=vmem, size = 0x18000, scoped, tag = 'input window, operand 3, single buffered']
    #allocation11 [shape = 's32[2]{0}', space=sflag, size = 0x8, scoped, tag = 'scoped memory for _lambda_.1']
    #allocation12 [shape = 'u8[65536]{0}', space=vmem, size = 0x10000, scoped, tag = 'input window, operand 5']
    #allocation13 [shape = 's32[2]{0}', space=sflag, size = 0x8, scoped, tag = 'scoped memory for _lambda_.1']
    %20 = vsyncpa [#allocation11], 0
    %21 = vsyncpa [#allocation13], 0
    %s22 = scalar_lea.sflag [#allocation13], 1
    %23 = vsyncpa %s22, 0
    loop: start=0, step=1, limit=5
    $region2: #{_lambda_.1} parent=1 // loop_pre_header
      _
    $region3: #{_lambda_.1} parent=1 // loop_header
      %s25 = sphi 0, %s29
      %p26 = scmp.ge.s32.totalorder %s25, 5
      %s33 = sphi 0, %s33
      %s35 = sphi 0, %s33
      %s36 = sphi 0, %s35
      %s50 = sphi 0, %s36
      %s54 = sphi 0, %s54
      %s56 = sphi 0, %s54
      %s57 = sphi 0, %s56
      %s71 = sphi 0, %s57
      %s75 = sphi 0, %s75
      %s77 = sphi 0, %s75
      %s78 = sphi 0, %s77
      %s92 = sphi 0, %s78
      %s98 = sphi 0, %s100
      %s101 = sphi 0, %s98
      %s102 = sphi 0, %s101
      %s118 = sphi 0, %s102
      %s124 = sphi 0, %s126
      %s127 = sphi 0, %s124
      %s128 = sphi 0, %s127
      %s144 = sphi 0, %s128
      %s148 = sphi 0, %s148
      %s150 = sphi 0, %s148
      %s151 = sphi 0, %s150
      %s165 = sphi 0, %s151
      %s169 = sphi 0, %s169
      %s171 = sphi 0, %s169
      %s172 = sphi 0, %s171
      %s186 = sphi 0, %s172
    $region4: #{_lambda_.1} parent=1 // loop_header_branch
      %28 = sbr.rel (%p26) target = $region8
    $region5: #{_lambda_.1} parent=1 // loop_body
      %s30 = ssub.s32 %s25, 1
      %s31 = ssub.s32 %s25, 2
      %s32 = sadd.s32 %s25, 1
      %s34 = sadd.s32 %s33, 1
      %p37 = scmp.eq.s32.totalorder %s25, 2
      %p38 = scmp.ne.s32.totalorder %s33, %s35
      %p39 = scmp.eq.s32.totalorder %s25, 0
      %p40 = por %p38, %p39
      %p41 = scmp.ne.s32.totalorder %s33, %s35
      %p42 = scmp.eq.s32.totalorder %s30, 2
      %p43 = por %p41, %p42
      %p44 = scmp.ne.s32.totalorder %s35, %s36
      %p45 = scmp.eq.s32.totalorder %s30, 0
      %p46 = por %p44, %p45
      %p47 = scmp.ne.s32.totalorder %s35, %s36
      %p48 = scmp.eq.s32.totalorder %s31, 2
      %p49 = por %p47, %p48
      %p51 = scmp.ne.s32.totalorder %s36, %s50
      %p52 = scmp.eq.s32.totalorder %s31, 0
      %p53 = por %p51, %p52
      %s55 = sadd.s32 %s54, 1
      %p58 = scmp.eq.s32.totalorder %s25, 2
      %p59 = scmp.ne.s32.totalorder %s54, %s56
      %p60 = scmp.eq.s32.totalorder %s25, 0
      %p61 = por %p59, %p60
      %p62 = scmp.ne.s32.totalorder %s54, %s56
      %p63 = scmp.eq.s32.totalorder %s30, 2
      %p64 = por %p62, %p63
      %p65 = scmp.ne.s32.totalorder %s56, %s57
      %p66 = scmp.eq.s32.totalorder %s30, 0
      %p67 = por %p65, %p66
      %p68 = scmp.ne.s32.totalorder %s56, %s57
      %p69 = scmp.eq.s32.totalorder %s31, 2
      %p70 = por %p68, %p69
      %p72 = scmp.ne.s32.totalorder %s57, %s71
      %p73 = scmp.eq.s32.totalorder %s31, 0
      %p74 = por %p72, %p73
      %s76 = sadd.s32 %s75, 1
      %p79 = scmp.eq.s32.totalorder %s25, 2
      %p80 = scmp.ne.s32.totalorder %s75, %s77
      %p81 = scmp.eq.s32.totalorder %s25, 0
      %p82 = por %p80, %p81
      %p83 = scmp.ne.s32.totalorder %s75, %s77
      %p84 = scmp.eq.s32.totalorder %s30, 2
      %p85 = por %p83, %p84
      %p86 = scmp.ne.s32.totalorder %s77, %s78
      %p87 = scmp.eq.s32.totalorder %s30, 0
      %p88 = por %p86, %p87
      %p89 = scmp.ne.s32.totalorder %s77, %s78
      %p90 = scmp.eq.s32.totalorder %s31, 2
      %p91 = por %p89, %p90
      %p93 = scmp.ne.s32.totalorder %s78, %s92
      %p94 = scmp.eq.s32.totalorder %s31, 0
      %p95 = por %p93, %p94
      %s96 = ssub.s32 %s25, %s32
      %p97 = scmp.eq.s32.totalorder %s96, 0
      %s99 = sadd.s32 %s98, 1
      %s100 = scalar_select %p97, %s98, %s99
      %p103 = pneg %p97
      %p104 = scmp.eq.s32.totalorder %s25, 2
      %p105 = por %p103, %p104
      %p106 = scmp.ne.s32.totalorder %s98, %s101
      %p107 = scmp.eq.s32.totalorder %s25, 0
      %p108 = por %p106, %p107
      %p109 = scmp.ne.s32.totalorder %s98, %s101
      %p110 = scmp.eq.s32.totalorder %s30, 2
      %p111 = por %p109, %p110
      %p112 = scmp.ne.s32.totalorder %s101, %s102
      %p113 = scmp.eq.s32.totalorder %s30, 0
      %p114 = por %p112, %p113
      %p115 = scmp.ne.s32.totalorder %s101, %s102
      %p116 = scmp.eq.s32.totalorder %s31, 2
      %p117 = por %p115, %p116
      %p119 = scmp.ne.s32.totalorder %s102, %s118
      %p120 = scmp.eq.s32.totalorder %s31, 0
      %p121 = por %p119, %p120
      %s122 = ssub.s32 %s25, %s32
      %p123 = scmp.eq.s32.totalorder %s122, 0
      %s125 = sadd.s32 %s124, 1
      %s126 = scalar_select %p123, %s124, %s125
      %p129 = pneg %p123
      %p130 = scmp.eq.s32.totalorder %s25, 2
      %p131 = por %p129, %p130
      %p132 = scmp.ne.s32.totalorder %s124, %s127
      %p133 = scmp.eq.s32.totalorder %s25, 0
      %p134 = por %p132, %p133
      %p135 = scmp.ne.s32.totalorder %s124, %s127
      %p136 = scmp.eq.s32.totalorder %s30, 2
      %p137 = por %p135, %p136
      %p138 = scmp.ne.s32.totalorder %s127, %s128
      %p139 = scmp.eq.s32.totalorder %s30, 0
      %p140 = por %p138, %p139
      %p141 = scmp.ne.s32.totalorder %s127, %s128
      %p142 = scmp.eq.s32.totalorder %s31, 2
      %p143 = por %p141, %p142
      %p145 = scmp.ne.s32.totalorder %s128, %s144
      %p146 = scmp.eq.s32.totalorder %s31, 0
      %p147 = por %p145, %p146
      %s149 = sadd.s32 %s148, 1
      %p152 = scmp.eq.s32.totalorder %s25, 2
      %p153 = scmp.ne.s32.totalorder %s148, %s150
      %p154 = scmp.eq.s32.totalorder %s25, 0
      %p155 = por %p153, %p154
      %p156 = scmp.ne.s32.totalorder %s148, %s150
      %p157 = scmp.eq.s32.totalorder %s30, 2
      %p158 = por %p156, %p157
      %p159 = scmp.ne.s32.totalorder %s150, %s151
      %p160 = scmp.eq.s32.totalorder %s30, 0
      %p161 = por %p159, %p160
      %p162 = scmp.ne.s32.totalorder %s150, %s151
      %p163 = scmp.eq.s32.totalorder %s31, 2
      %p164 = por %p162, %p163
      %p166 = scmp.ne.s32.totalorder %s151, %s165
      %p167 = scmp.eq.s32.totalorder %s31, 0
      %p168 = por %p166, %p167
      %s170 = sadd.s32 %s169, 1
      %p173 = scmp.eq.s32.totalorder %s25, 2
      %p174 = scmp.ne.s32.totalorder %s169, %s171
      %p175 = scmp.eq.s32.totalorder %s25, 0
      %p176 = por %p174, %p175
      %p177 = scmp.ne.s32.totalorder %s169, %s171
      %p178 = scmp.eq.s32.totalorder %s30, 2
      %p179 = por %p177, %p178
      %p180 = scmp.ne.s32.totalorder %s171, %s172
      %p181 = scmp.eq.s32.totalorder %s30, 0
      %p182 = por %p180, %p181
      %p183 = scmp.ne.s32.totalorder %s171, %s172
      %p184 = scmp.eq.s32.totalorder %s31, 2
      %p185 = por %p183, %p184
      %p187 = scmp.ne.s32.totalorder %s172, %s186
      %p188 = scmp.eq.s32.totalorder %s31, 0
      %p189 = por %p187, %p188
      %p190 = scmp.le.s32.totalorder 1, %s25
      %p191 = scmp.lt.s32.totalorder %s25, 4
      %p192 = pnand %p190, %p191
      %p193 = pneg %p192
      // Predicated region
      $region9: #{_lambda_.1} parent=5 // pred_check
        _
      $region10: #{_lambda_.1} parent=5 // pred_check_branch
        %195 = sbr.rel (%p192) target = $region12
      $region11: #{_lambda_.1} parent=5 // pred_region
        %s196 = ssub.s32 %s25, 1
        // Predicated region
        $region13: #{_lambda_.1} parent=11 // pred_check
          %p197 = pneg %p46
        $region14: #{_lambda_.1} parent=11 // pred_check_branch
          %199 = sbr.rel (%p197) target = $region16
        $region15: #{_lambda_.1} parent=11 // pred_region
          _
        $region16: #{_lambda_.1} parent=11 // pred_fallthru
          _
        // Predicated region
        $region17: #{_lambda_.1} parent=11 // pred_check
          %p200 = pneg %p67
        $region18: #{_lambda_.1} parent=11 // pred_check_branch
          %202 = sbr.rel (%p200) target = $region20
        $region19: #{_lambda_.1} parent=11 // pred_region
          %s204 = ssub.s32 3072, 3072
          %205 = vsyncadd [#allocation11], %s204
          %s206 = sshll.u32 [#allocation10], 4
          %s207 = int_to_ptr.vmem [resolvable:$true] %s206
          %212 = dma.hbm_to_vmem [thread:$0]  %s3, 3072, %s207, [#allocation11], 192, 192, 12
        $region20: #{_lambda_.1} parent=11 // pred_fallthru
          _
        // Predicated region
        $region21: #{_lambda_.1} parent=11 // pred_check
          %p213 = pneg %p88
        $region22: #{_lambda_.1} parent=11 // pred_check_branch
          %215 = sbr.rel (%p213) target = $region24
        $region23: #{_lambda_.1} parent=11 // pred_region
          _
        $region24: #{_lambda_.1} parent=11 // pred_fallthru
          _
      $region12: #{_lambda_.1} parent=5 // pred_fallthru
        _
      %p216 = scmp.lt.s32.totalorder %s25, 3
      // Predicated region
      $region25: #{_lambda_.1} parent=5 // pred_check
        %p217 = pneg %p216
      $region26: #{_lambda_.1} parent=5 // pred_check_branch
        %219 = sbr.rel (%p217) target = $region28
      $region27: #{_lambda_.1} parent=5 // pred_region
        // Predicated region
        $region29: #{_lambda_.1} parent=27 // pred_check
          %p220 = pneg %p108
        $region30: #{_lambda_.1} parent=27 // pred_check_branch
          %222 = sbr.rel (%p220) target = $region32
        $region31: #{_lambda_.1} parent=27 // pred_region
          %s223 = sand.u32 %s98, 1
          %s224 = scalar_lea.sflag [#allocation13], %s223
          %s225 = sand.u32 %s98, 1
          %s226 = smul.addr %s225, 64
          %s227 = scalar_lea.vmem [#allocation12], %s226
          %s229 = ssub.s32 1024, 1024
          %230 = vsyncadd %s224, %s229
          %s231 = smul.addr %s25, 64
          %s232 = scalar_lea.hbm %s5, %s231
          %s233 = sshll.u32 %s227, 4
          %s234 = int_to_ptr.vmem [resolvable:$true] %s233
          %239 = dma.hbm_to_vmem [thread:$0]  %s232, 1024, %s234, %s224, 192, 64, 4
        $region32: #{_lambda_.1} parent=27 // pred_fallthru
          _
        // Predicated region
        $region33: #{_lambda_.1} parent=27 // pred_check
          %p240 = pneg %p134
        $region34: #{_lambda_.1} parent=27 // pred_check_branch
          %242 = sbr.rel (%p240) target = $region36
        $region35: #{_lambda_.1} parent=27 // pred_region
          %p243 = scmp.lt.s32.totalorder %s25, 2
          %s244 = scalar_select %p243, %s25, 2
          %s245 = scalar_lea.vmem %s6, %s244
        $region36: #{_lambda_.1} parent=27 // pred_fallthru
          _
      $region28: #{_lambda_.1} parent=5 // pred_fallthru
        _
      %p246 = scmp.le.s32.totalorder 1, %s25
      %p247 = scmp.lt.s32.totalorder %s25, 4
      %p248 = pnand %p246, %p247
      %p249 = pneg %p248
      // Predicated region
      $region37: #{_lambda_.1} parent=5 // pred_check
        _
      $region38: #{_lambda_.1} parent=5 // pred_check_branch
        %251 = sbr.rel (%p248) target = $region40
      $region39: #{_lambda_.1} parent=5 // pred_region
        %s252 = ssub.s32 %s25, 1
        // Predicated region
        $region41: #{_lambda_.1} parent=39 // pred_check
          %p253 = pneg %p67
        $region42: #{_lambda_.1} parent=39 // pred_check_branch
          %255 = sbr.rel (%p253) target = $region44
        $region43: #{_lambda_.1} parent=39 // pred_region
          %256 = dma.done [#allocation11], 3072
        $region44: #{_lambda_.1} parent=39 // pred_fallthru
          _
        %s257 = sand.u32 %s101, 1
        %s258 = scalar_lea.sflag [#allocation13], %s257
        %s259 = sand.u32 %s101, 1
        %s260 = smul.addr %s259, 64
        %s261 = scalar_lea.vmem [#allocation12], %s260
        // Predicated region
        $region45: #{_lambda_.1} parent=39 // pred_check
          %p262 = pneg %p114
        $region46: #{_lambda_.1} parent=39 // pred_check_branch
          %264 = sbr.rel (%p262) target = $region48
        $region47: #{_lambda_.1} parent=39 // pred_region
          %265 = dma.done %s258, 1024
        $region48: #{_lambda_.1} parent=39 // pred_fallthru
          _
        %p266 = pneg %p46
        %p267 = pneg %p43
        %p268 = pneg %p67
        %p269 = pneg %p64
        %p270 = pneg %p88
        %p271 = pneg %p85
        %s272 = sand.u32 %s101, 1
        %s273 = scalar_lea.sflag [#allocation13], %s272
        %s274 = sand.u32 %s101, 1
        %s275 = smul.addr %s274, 64
        %s276 = scalar_lea.vmem [#allocation12], %s275
        %p277 = pneg %p114
        %p278 = pneg %p111
        %p279 = scmp.lt.s32.totalorder %s30, 2
        %s280 = scalar_select %p279, %s30, 2
        %s281 = scalar_lea.vmem %s6, %s280
        %p282 = pneg %p140
        %p283 = pneg %p137
        %p284 = pneg %p161
        %p285 = pneg %p158
        %p286 = pneg %p182
        %p287 = pneg %p179
        %p288 = scmp.lt.s32.totalorder %s30, 2
        %s289 = scalar_select %p288, %s30, 2
        %s290 = scalar_lea.vmem %s6, %s289
        %p292 = scmp.eq.s32.totalorder %s30, 0
        // Predicated region
        $region49: #{_lambda_.1} parent=39 // pred_check
          %p293 = pneg %p292
        $region50: #{_lambda_.1} parent=39 // pred_check_branch
          %295 = sbr.rel (%p293) target = $region52
        $region51: #{_lambda_.1} parent=39 // pred_region
          %s296 = sld [smem:[#allocation9]]
          %s297 = sshrl.u32 %s296, 3
          %s298 = sand.u32 %s296, 7
          %s299 = smul.u32 %s297, 24
          %s300 = sadd.s32 %s298, %s299
          %s301 = smul.addr %s300, 16
          %s302 = scalar_lea.hbm %s1, %s301
          %s304 = sshll.u32 [#allocation2], 4
          %s305 = int_to_ptr.vmem [resolvable:$true] %s304
          %307 = dma.hbm_to_vmem [thread:$0]  %s302, 48, %s305, [#allocation7], 128, 128, 1
          %s308 = sld [smem:[#allocation9 + $0x1]]
          %s309 = sshrl.u32 %s308, 3
          %s310 = sand.u32 %s308, 7
          %s311 = smul.u32 %s309, 24
          %s312 = sadd.s32 %s310, %s311
          %s313 = smul.addr %s312, 16
          %s314 = scalar_lea.hbm %s1, %s313
          %s315 = scalar_lea.vmem [#allocation2], 1
          %s316 = scalar_lea.sflag [#allocation7], 1
          %s318 = sshll.u32 %s315, 4
          %s319 = int_to_ptr.vmem [resolvable:$true] %s318
          %321 = dma.hbm_to_vmem [thread:$0]  %s314, 48, %s319, %s316, 128, 128, 1
          %s322 = sld [smem:[#allocation9 + $0x2]]
          %s323 = sshrl.u32 %s322, 3
          %s324 = sand.u32 %s322, 7
          %s325 = smul.u32 %s323, 24
          %s326 = sadd.s32 %s324, %s325
          %s327 = smul.addr %s326, 16
          %s328 = scalar_lea.hbm %s1, %s327
          %s329 = scalar_lea.vmem [#allocation2], 2
          %s330 = scalar_lea.sflag [#allocation7], 2
          %s332 = sshll.u32 %s329, 4
          %s333 = int_to_ptr.vmem [resolvable:$true] %s332
          %335 = dma.hbm_to_vmem [thread:$0]  %s328, 48, %s333, %s330, 128, 128, 1
          %s336 = sld [smem:[#allocation9 + $0x3]]
          %s337 = sshrl.u32 %s336, 3
          %s338 = sand.u32 %s336, 7
          %s339 = smul.u32 %s337, 24
          %s340 = sadd.s32 %s338, %s339
          %s341 = smul.addr %s340, 16
          %s342 = scalar_lea.hbm %s1, %s341
          %s343 = scalar_lea.vmem [#allocation2], 3
          %s344 = scalar_lea.sflag [#allocation7], 3
          %s346 = sshll.u32 %s343, 4
          %s347 = int_to_ptr.vmem [resolvable:$true] %s346
          %349 = dma.hbm_to_vmem [thread:$0]  %s342, 48, %s347, %s344, 128, 128, 1
          %s350 = sld [smem:[#allocation9 + $0x4]]
          %s351 = sshrl.u32 %s350, 3
          %s352 = sand.u32 %s350, 7
          %s353 = smul.u32 %s351, 24
          %s354 = sadd.s32 %s352, %s353
          %s355 = smul.addr %s354, 16
          %s356 = scalar_lea.hbm %s1, %s355
          %s357 = scalar_lea.vmem [#allocation2], 4
          %s358 = scalar_lea.sflag [#allocation7], 4
          %s360 = sshll.u32 %s357, 4
          %s361 = int_to_ptr.vmem [resolvable:$true] %s360
          %363 = dma.hbm_to_vmem [thread:$0]  %s356, 48, %s361, %s358, 128, 128, 1
          %s364 = sld [smem:[#allocation9 + $0x5]]
          %s365 = sshrl.u32 %s364, 3
          %s366 = sand.u32 %s364, 7
          %s367 = smul.u32 %s365, 24
          %s368 = sadd.s32 %s366, %s367
          %s369 = smul.addr %s368, 16
          %s370 = scalar_lea.hbm %s1, %s369
          %s371 = scalar_lea.vmem [#allocation2], 5
          %s372 = scalar_lea.sflag [#allocation7], 5
          %s374 = sshll.u32 %s371, 4
          %s375 = int_to_ptr.vmem [resolvable:$true] %s374
          %377 = dma.hbm_to_vmem [thread:$0]  %s370, 48, %s375, %s372, 128, 128, 1
          %s378 = sld [smem:[#allocation9 + $0x6]]
          %s379 = sshrl.u32 %s378, 3
          %s380 = sand.u32 %s378, 7
          %s381 = smul.u32 %s379, 24
          %s382 = sadd.s32 %s380, %s381
          %s383 = smul.addr %s382, 16
          %s384 = scalar_lea.hbm %s1, %s383
          %s385 = scalar_lea.vmem [#allocation2], 6
          %s386 = scalar_lea.sflag [#allocation7], 6
          %s388 = sshll.u32 %s385, 4
          %s389 = int_to_ptr.vmem [resolvable:$true] %s388
          %391 = dma.hbm_to_vmem [thread:$0]  %s384, 48, %s389, %s386, 128, 128, 1
          %s392 = sld [smem:[#allocation9 + $0x7]]
          %s393 = sshrl.u32 %s392, 3
          %s394 = sand.u32 %s392, 7
          %s395 = smul.u32 %s393, 24
          %s396 = sadd.s32 %s394, %s395
          %s397 = smul.addr %s396, 16
          %s398 = scalar_lea.hbm %s1, %s397
          %s399 = scalar_lea.vmem [#allocation2], 7
          %s400 = scalar_lea.sflag [#allocation7], 7
          %s402 = sshll.u32 %s399, 4
          %s403 = int_to_ptr.vmem [resolvable:$true] %s402
          %405 = dma.hbm_to_vmem [thread:$0]  %s398, 48, %s403, %s400, 128, 128, 1
          %s406 = sld [smem:[#allocation9]]
          %s407 = smul.u32 1, 3
          %s408 = sshll.u32 %s407, 4
          %409 = dma.done [#allocation7], %s408
          %s410 = sld [smem:[#allocation9 + $0x1]]
          %s411 = sshll.u32 %s407, 4
          %412 = dma.done %s316, %s411
          %s413 = sld [smem:[#allocation9 + $0x2]]
          %s414 = sshll.u32 %s407, 4
          %415 = dma.done %s330, %s414
          %s416 = sld [smem:[#allocation9 + $0x3]]
          %s417 = sshll.u32 %s407, 4
          %418 = dma.done %s344, %s417
          %s419 = sld [smem:[#allocation9 + $0x4]]
          %s420 = sshll.u32 %s407, 4
          %421 = dma.done %s358, %s420
          %s422 = sld [smem:[#allocation9 + $0x5]]
          %s423 = sshll.u32 %s407, 4
          %424 = dma.done %s372, %s423
          %s425 = sld [smem:[#allocation9 + $0x6]]
          %s426 = sshll.u32 %s407, 4
          %427 = dma.done %s386, %s426
          %s428 = sld [smem:[#allocation9 + $0x7]]
          %s429 = sshll.u32 %s407, 4
          %430 = dma.done %s400, %s429
          %v431 = vld [vmem:[#allocation2] sm:$0xff]
          %v432 = vld [vmem:[#allocation2 + $0x8] sm:$0xff]
          %v433 = vld [vmem:[#allocation2 + $0x10] sm:$0xff]
          %v434 = vld [vmem:[%s2] sm:$0xff]
          %v435 = vpack.c.bf16 %v434, %v434
          %v436 = vld [vmem:[#allocation10] sm:$0xff]
          %v437 = vld [vmem:[#allocation10 + $0x8] sm:$0xf]
          %v438 = vld [vmem:[#allocation10 + $0xc] sm:$0xff]
          %v439 = vld [vmem:[#allocation10 + $0x14] sm:$0xf]
          %v440 = vld [vmem:[#allocation10 + $0x18] sm:$0xff]
          %v441 = vld [vmem:[#allocation10 + $0x20] sm:$0xf]
          %v442 = vld [vmem:[#allocation10 + $0x24] sm:$0xff]
          %v443 = vld [vmem:[#allocation10 + $0x2c] sm:$0xf]
          %v444 = vld [vmem:[#allocation10 + $0x30] sm:$0xff]
          %v445 = vld [vmem:[#allocation10 + $0x38] sm:$0xf]
          %v446 = vld [vmem:[#allocation10 + $0x3c] sm:$0xff]
          %v447 = vld [vmem:[#allocation10 + $0x44] sm:$0xf]
          %v448 = vld [vmem:[#allocation10 + $0x48] sm:$0xff]
          %v449 = vld [vmem:[#allocation10 + $0x50] sm:$0xf]
          %v450 = vld [vmem:[#allocation10 + $0x54] sm:$0xff]
          %v451 = vld [vmem:[#allocation10 + $0x5c] sm:$0xf]
          %v452 = vld [vmem:[#allocation10 + $0x60] sm:$0xff]
          %v453 = vld [vmem:[#allocation10 + $0x68] sm:$0xf]
          %v454 = vld [vmem:[#allocation10 + $0x6c] sm:$0xff]
          %v455 = vld [vmem:[#allocation10 + $0x74] sm:$0xf]
          %v456 = vld [vmem:[#allocation10 + $0x78] sm:$0xff]
          %v457 = vld [vmem:[#allocation10 + $0x80] sm:$0xf]
          %v458 = vld [vmem:[#allocation10 + $0x84] sm:$0xff]
          %v459 = vld [vmem:[#allocation10 + $0x8c] sm:$0xf]
          %v460 = vld [vmem:[#allocation10 + $0x90] sm:$0xff]
          %v461 = vld [vmem:[#allocation10 + $0x98] sm:$0xf]
          %v462 = vld [vmem:[#allocation10 + $0x9c] sm:$0xff]
          %v463 = vld [vmem:[#allocation10 + $0xa4] sm:$0xf]
          %v464 = vld [vmem:[#allocation10 + $0xa8] sm:$0xff]
          %v465 = vld [vmem:[#allocation10 + $0xb0] sm:$0xf]
          %v466 = vld [vmem:[#allocation10 + $0xb4] sm:$0xff]
          %v467 = vld [vmem:[#allocation10 + $0xbc] sm:$0xf]
          %v468 = vld [vmem:[%s4] sm:$0x7]
          %v470 = vlaneseq
          %v471 = vshrl.u32 %v470, 7
          %v472 = vsub.s32 0, %v471
          %v473 = vrot.slane %v468, %v472
          %v474 = vlaneseq
          %v475 = vshrl.u32 %v474, 7
          %v476 = vsub.s32 1, %v475
          %v477 = vrot.slane %v468, %v476
          %v478 = vlaneseq
          %v479 = vshrl.u32 %v478, 7
          %v480 = vsub.s32 2, %v479
          %v481 = vrot.slane %v468, %v480
          %v517 = vunpack.c.l.b16 %v436
          %v518 = vunpack.c.h.b16 %v436
          %v519 = vunpack.c.l.b16 %v437
          %v520 = vunpack.c.l.b16 %v438
          %v521 = vunpack.c.h.b16 %v438
          %v522 = vunpack.c.l.b16 %v439
          %v523 = vunpack.c.l.b16 %v440
          %v524 = vunpack.c.h.b16 %v440
          %v525 = vunpack.c.l.b16 %v441
          %v526 = vunpack.c.l.b16 %v442
          %v527 = vunpack.c.h.b16 %v442
          %v528 = vunpack.c.l.b16 %v443
          %v529 = vunpack.c.l.b16 %v444
          %v530 = vunpack.c.h.b16 %v444
          %v531 = vunpack.c.l.b16 %v445
          %v532 = vunpack.c.l.b16 %v446
          %v533 = vunpack.c.h.b16 %v446
          %v534 = vunpack.c.l.b16 %v447
          %v535 = vunpack.c.l.b16 %v448
          %v536 = vunpack.c.h.b16 %v448
          %v537 = vunpack.c.l.b16 %v449
          %v538 = vunpack.c.l.b16 %v450
          %v539 = vunpack.c.h.b16 %v450
          %v540 = vunpack.c.l.b16 %v451
          %v541 = vunpack.c.l.b16 %v452
          %v542 = vunpack.c.h.b16 %v452
          %v543 = vunpack.c.l.b16 %v453
          %v544 = vunpack.c.l.b16 %v454
          %v545 = vunpack.c.h.b16 %v454
          %v546 = vunpack.c.l.b16 %v455
          %v547 = vunpack.c.l.b16 %v456
          %v548 = vunpack.c.h.b16 %v456
          %v549 = vunpack.c.l.b16 %v457
          %v550 = vunpack.c.l.b16 %v458
          %v551 = vunpack.c.h.b16 %v458
          %v552 = vunpack.c.l.b16 %v459
          %v553 = vunpack.c.l.b16 %v460
          %v554 = vunpack.c.h.b16 %v460
          %v555 = vunpack.c.l.b16 %v461
          %v556 = vunpack.c.l.b16 %v462
          %v557 = vunpack.c.h.b16 %v462
          %v558 = vunpack.c.l.b16 %v463
          %v559 = vunpack.c.l.b16 %v464
          %v560 = vunpack.c.h.b16 %v464
          %v561 = vunpack.c.l.b16 %v465
          %v562 = vunpack.c.l.b16 %v466
          %v563 = vunpack.c.h.b16 %v466
          %v564 = vunpack.c.l.b16 %v467
          %v565 = vpack.c.b16 %v520, %v517
          %v566 = vpack.c.b16 %v521, %v518
          %v567 = vpack.c.b16 %v522, %v519
          %v568 = vpack.c.b16 %v526, %v523
          %v569 = vpack.c.b16 %v527, %v524
          %v570 = vpack.c.b16 %v528, %v525
          %v571 = vpack.c.b16 %v532, %v529
          %v572 = vpack.c.b16 %v533, %v530
          %v573 = vpack.c.b16 %v534, %v531
          %v574 = vpack.c.b16 %v538, %v535
          %v575 = vpack.c.b16 %v539, %v536
          %v576 = vpack.c.b16 %v540, %v537
          %v577 = vpack.c.b16 %v544, %v541
          %v578 = vpack.c.b16 %v545, %v542
          %v579 = vpack.c.b16 %v546, %v543
          %v580 = vpack.c.b16 %v550, %v547
          %v581 = vpack.c.b16 %v551, %v548
          %v582 = vpack.c.b16 %v552, %v549
          %v583 = vpack.c.b16 %v556, %v553
          %v584 = vpack.c.b16 %v557, %v554
          %v585 = vpack.c.b16 %v558, %v555
          %v586 = vpack.c.b16 %v562, %v559
          %v587 = vpack.c.b16 %v563, %v560
          %v588 = vpack.c.b16 %v564, %v561
          %613 = vmatprep.subr.bf16.mxu0 %v587
          %614 = vmatpush1.bf16.msra.mxu0 %v586
          %615 = vmatprep.subr.bf16.mxu0 %v584
          %616 = vmatpush1.bf16.msra.mxu0 %v583
          %617 = vmatprep.subr.bf16.mxu0 %v581
          %618 = vmatpush1.bf16.msra.mxu0 %v580
          %619 = vmatprep.subr.bf16.mxu0 %v578
          %620 = vmatpush1.bf16.msra.mxu0 %v577
          %621 = vmatprep.subr.bf16.mxu0 %v575
          %622 = vmatpush1.bf16.msra.mxu0 %v574
          %623 = vmatprep.subr.bf16.mxu0 %v572
          %624 = vmatpush1.bf16.msra.mxu0 %v571
          %625 = vmatprep.subr.bf16.mxu0 %v569
          %626 = vmatpush1.bf16.msra.mxu0 %v568
          %627 = vmatprep.subr.bf16.mxu0 %v566
          %628 = vmatpush1.bf16.msra.mxu0 %v565
          %629 = vmatprep.subr.bf16.mxu0 0
          %630 = vmatpush2.bf16.msra.mxu0 0
          %631 = vmatprep.subr.bf16.mxu0 0
          %632 = vmatpush2.bf16.msra.mxu0 0
          %633 = vmatprep.subr.bf16.mxu0 0
          %634 = vmatpush2.bf16.msra.mxu0 0
          %635 = vmatprep.subr.bf16.mxu0 0
          %636 = vmatpush2.bf16.msra.mxu0 0
          %637 = vmatprep.subr.bf16.mxu0 0
          %638 = vmatpush2.bf16.msra.mxu0 0
          %639 = vmatprep.subr.bf16.mxu0 0
          %640 = vmatpush2.bf16.msra.mxu0 0
          %641 = vmatprep.subr.bf16.mxu0 0
          %642 = vmatpush2.bf16.msra.mxu0 0
          %643 = vmatprep.subr.bf16.mxu0 0
          %644 = vmatpush2.bf16.msra.mxu0 0
          %645 = vmatprep.mubr.bf16.mxu0 0
          %646 = vmatmul.mubr.bf16.gmra.mxu0 %v435
          %v647 = vpop.f32.mrf.mxu0
          %v648 = vadd.f32 %v473, %v647
          %v649 = vpop.f32.mrf.mxu0
          %v650 = vadd.f32 %v477, %v649
          %v651 = vpop.f32.mrf.mxu0
          %v652 = vpop.f32.mrf.mxu0
          %653 = vdwg.mxu0
          %654 = vmatprep.subr.bf16.mxu0 0
          %655 = vmatpush1.bf16.msra.mxu0 %v588
          %656 = vmatprep.subr.bf16.mxu0 0
          %657 = vmatpush1.bf16.msra.mxu0 %v585
          %658 = vmatprep.subr.bf16.mxu0 0
          %659 = vmatpush1.bf16.msra.mxu0 %v582
          %660 = vmatprep.subr.bf16.mxu0 0
          %661 = vmatpush1.bf16.msra.mxu0 %v579
          %662 = vmatprep.subr.bf16.mxu0 0
          %663 = vmatpush1.bf16.msra.mxu0 %v576
          %664 = vmatprep.subr.bf16.mxu0 0
          %665 = vmatpush1.bf16.msra.mxu0 %v573
          %666 = vmatprep.subr.bf16.mxu0 0
          %667 = vmatpush1.bf16.msra.mxu0 %v570
          %668 = vmatprep.subr.bf16.mxu0 0
          %669 = vmatpush1.bf16.msra.mxu0 %v567
          %670 = vmatprep.subr.bf16.mxu0 0
          %671 = vmatpush2.bf16.msra.mxu0 0
          %672 = vmatprep.subr.bf16.mxu0 0
          %673 = vmatpush2.bf16.msra.mxu0 0
          %674 = vmatprep.subr.bf16.mxu0 0
          %675 = vmatpush2.bf16.msra.mxu0 0
          %676 = vmatprep.subr.bf16.mxu0 0
          %677 = vmatpush2.bf16.msra.mxu0 0
          %678 = vmatprep.subr.bf16.mxu0 0
          %679 = vmatpush2.bf16.msra.mxu0 0
          %680 = vmatprep.subr.bf16.mxu0 0
          %681 = vmatpush2.bf16.msra.mxu0 0
          %682 = vmatprep.subr.bf16.mxu0 0
          %683 = vmatpush2.bf16.msra.mxu0 0
          %684 = vmatprep.subr.bf16.mxu0 0
          %685 = vmatpush2.bf16.msra.mxu0 0
          %686 = vmatprep.mubr.bf16.mxu0 0
          %687 = vmatmul.mubr.bf16.gmra.mxu0 %v435
          %v688 = vpop.f32.mrf.mxu0
          %v689 = vadd.f32 %v481, %v688
          %v690 = vpop.f32.mrf.mxu0
          %v691 = vpop.f32.mrf.mxu0
          %v692 = vpop.f32.mrf.mxu0
          %693 = vdwg.mxu0
          %v694 = vadd.f32 %v431, %v648
          %v695 = vxor.u32 %v694, 2147483648
          %v696 = vmul.f32 %v695, 1.442695
          %v697 = vpow.pop %v696
          %v698 = vadd.f32 %v697, 1.0
          %v699 = vrcp.pop %v698
          %v700 = vmul.f32 1.0, %v699
          %v701 = vadd.f32 %v432, %v650
          %v702 = vxor.u32 %v701, 2147483648
          %v703 = vmul.f32 %v702, 1.442695
          %v704 = vpow.pop %v703
          %v705 = vadd.f32 %v704, 1.0
          %v706 = vrcp.pop %v705
          %v707 = vmul.f32 1.0, %v706
          %v708 = vmul.f32 %v700, %v689
          %v709 = vadd.f32 %v433, %v708
          %v710 = vtanh.pop %v709
          %v711 = vsub.f32 1.0, %v707
          %v712 = vmul.f32 %v711, %v710
          %v713 = vmul.f32 %v707, %v434
          %v714 = vadd.f32 %v712, %v713
          %715 = vst [vmem:[#allocation3] sm:$0xff] %v714
          %vm716 = vcmask 7168
          %717 = vst.msk [vmem:[#allocation5] sm:$0xff] %vm716, -1e+30
          %718 = vst.msk [vmem:[#allocation6] sm:$0xff] %vm716, 0.0
        $region52: #{_lambda_.1} parent=39 // pred_fallthru
          _
        %v719 = vld [vmem:[#allocation3] sm:$0xff]
        %v720 = vpack.c.bf16 %v719, %v719
        %v721 = vld [vmem:[%s261] sm:$0xf]
        %v722 = vld [vmem:[%s261 + $0x4] sm:$0xf]
        %v723 = vld [vmem:[%s261 + $0x8] sm:$0xf]
        %v724 = vld [vmem:[%s261 + $0xc] sm:$0xf]
        %v725 = vld [vmem:[%s261 + $0x10] sm:$0xf]
        %v726 = vld [vmem:[%s261 + $0x14] sm:$0xf]
        %v727 = vld [vmem:[%s261 + $0x18] sm:$0xf]
        %v728 = vld [vmem:[%s261 + $0x1c] sm:$0xf]
        %v729 = vld [vmem:[%s261 + $0x20] sm:$0xf]
        %v730 = vld [vmem:[%s261 + $0x24] sm:$0xf]
        %v731 = vld [vmem:[%s261 + $0x28] sm:$0xf]
        %v732 = vld [vmem:[%s261 + $0x2c] sm:$0xf]
        %v733 = vld [vmem:[%s261 + $0x30] sm:$0xf]
        %v734 = vld [vmem:[%s261 + $0x34] sm:$0xf]
        %v735 = vld [vmem:[%s261 + $0x38] sm:$0xf]
        %v736 = vld [vmem:[%s261 + $0x3c] sm:$0xf]
        %v737 = vld [vmem:[%s290] sm:$0x1]
        %v739 = vlaneseq
        %v740 = vshrl.u32 %v739, 7
        %v741 = vsub.s32 0, %v740
        %v742 = vrot.slane %v737, %v741
        %v760 = vunpack.c.l.b16 %v721
        %v761 = vunpack.c.l.b16 %v722
        %v762 = vunpack.c.l.b16 %v723
        %v763 = vunpack.c.l.b16 %v724
        %v764 = vunpack.c.l.b16 %v725
        %v765 = vunpack.c.l.b16 %v726
        %v766 = vunpack.c.l.b16 %v727
        %v767 = vunpack.c.l.b16 %v728
        %v768 = vunpack.c.l.b16 %v729
        %v769 = vunpack.c.l.b16 %v730
        %v770 = vunpack.c.l.b16 %v731
        %v771 = vunpack.c.l.b16 %v732
        %v772 = vunpack.c.l.b16 %v733
        %v773 = vunpack.c.l.b16 %v734
        %v774 = vunpack.c.l.b16 %v735
        %v775 = vunpack.c.l.b16 %v736
        %v776 = vpack.c.b16 %v761, %v760
        %v777 = vpack.c.b16 %v763, %v762
        %v778 = vpack.c.b16 %v765, %v764
        %v779 = vpack.c.b16 %v767, %v766
        %v780 = vpack.c.b16 %v769, %v768
        %v781 = vpack.c.b16 %v771, %v770
        %v782 = vpack.c.b16 %v773, %v772
        %v783 = vpack.c.b16 %v775, %v774
        %792 = vmatprep.subr.bf16.mxu0 0
        %793 = vmatpush1.bf16.msra.mxu0 %v783
        %794 = vmatprep.subr.bf16.mxu0 0
        %795 = vmatpush1.bf16.msra.mxu0 %v782
        %796 = vmatprep.subr.bf16.mxu0 0
        %797 = vmatpush1.bf16.msra.mxu0 %v781
        %798 = vmatprep.subr.bf16.mxu0 0
        %799 = vmatpush1.bf16.msra.mxu0 %v780
        %800 = vmatprep.subr.bf16.mxu0 0
        %801 = vmatpush1.bf16.msra.mxu0 %v779
        %802 = vmatprep.subr.bf16.mxu0 0
        %803 = vmatpush1.bf16.msra.mxu0 %v778
        %804 = vmatprep.subr.bf16.mxu0 0
        %805 = vmatpush1.bf16.msra.mxu0 %v777
        %806 = vmatprep.subr.bf16.mxu0 0
        %807 = vmatpush1.bf16.msra.mxu0 %v776
        %808 = vmatprep.subr.bf16.mxu0 0
        %809 = vmatpush2.bf16.msra.mxu0 0
        %810 = vmatprep.subr.bf16.mxu0 0
        %811 = vmatpush2.bf16.msra.mxu0 0
        %812 = vmatprep.subr.bf16.mxu0 0
        %813 = vmatpush2.bf16.msra.mxu0 0
        %814 = vmatprep.subr.bf16.mxu0 0
        %815 = vmatpush2.bf16.msra.mxu0 0
        %816 = vmatprep.subr.bf16.mxu0 0
        %817 = vmatpush2.bf16.msra.mxu0 0
        %818 = vmatprep.subr.bf16.mxu0 0
        %819 = vmatpush2.bf16.msra.mxu0 0
        %820 = vmatprep.subr.bf16.mxu0 0
        %821 = vmatpush2.bf16.msra.mxu0 0
        %822 = vmatprep.subr.bf16.mxu0 0
        %823 = vmatpush2.bf16.msra.mxu0 0
        %824 = vmatprep.mubr.bf16.mxu0 0
        %825 = vmatmul.mubr.bf16.gmra.mxu0 %v720
        %v826 = vpop.f32.mrf.mxu0
        %v827 = vadd.f32 %v742, %v826
        %v828 = vpop.f32.mrf.mxu0
        %v829 = vpop.f32.mrf.mxu0
        %v830 = vpop.f32.mrf.mxu0
        %831 = vdwg.mxu0
        %s832 = smul.u32 %s30, 8
        %s833 = scalar_lea.vmem [#allocation4], %s832
        %834 = vst [vmem:[%s833] sm:$0xff] %v827
        %v835 = vld [vmem:[#allocation5] sm:$0xff]
        %836 = vmax.xlane.f32.xlu0 %v827
        %v837 = vpop.xlane.xlu0 %836
        %v838 = vmax.f32 %v835, %v837
        %v839 = vld [vmem:[#allocation6] sm:$0xff]
        %v840 = vsub.f32 %v835, %v838
        %v841 = vmul.f32 %v840, 1.442695
        %v842 = vpow.pop %v841
        %v843 = vmul.f32 %v839, %v842
        %845 = vset.pattern.permute.xlu0 0
        %846 = vperm.xlu0 %845, %v838
        %v847 = vpop.permute.xlu0 %846
        %v849 = vsub.f32 %v827, %v847
        %v850 = vmul.f32 %v849, 1.442695
        %v851 = vpow.pop %v850
        %852 = vadd.xlane.f32.xlu0 %v851
        %v853 = vpop.xlane.xlu0 %852
        %v854 = vadd.f32 %v843, %v853
        %vm855 = vcmask 7168
        %856 = vst.msk [vmem:[#allocation6] sm:$0xff] %vm855, %v854
        %857 = vst.msk [vmem:[#allocation5] sm:$0xff] %vm855, %v838
        %p858 = scmp.eq.s32.totalorder %s30, 2
        // Predicated region
        $region53: #{_lambda_.1} parent=39 // pred_check
          %p859 = pneg %p858
        $region54: #{_lambda_.1} parent=39 // pred_check_branch
          %861 = sbr.rel (%p859) target = $region56
        $region55: #{_lambda_.1} parent=39 // pred_region
          %v862 = vld [vmem:[#allocation5] sm:$0xff]
          %v863 = vld [vmem:[#allocation6] sm:$0xff]
          %v864 = vlog2.pop %v863
          %v865 = vmul.f32 %v864, 0.6931472
          %v866 = vadd.f32 %v862, %v865
          %v867 = vld [vmem:[#allocation4] sm:$0xff]
          %869 = vset.pattern.permute.xlu0 0
          %870 = vperm.xlu0 %869, %v866
          %v871 = vpop.permute.xlu0 %870
          %v873 = vsub.f32 %v867, %v871
          %874 = vst [vmem:[%s7] sm:$0xff] %v873
          %s875 = scalar_lea.vmem [#allocation4], 8
          %v876 = vld [vmem:[%s875] sm:$0xff]
          %v877 = vsub.f32 %v876, %v871
          %878 = vst [vmem:[%s7 + $0x8] sm:$0xff] %v877
          %s879 = scalar_lea.vmem [#allocation4], 16
          %v880 = vld [vmem:[%s879] sm:$0xff]
          %v881 = vsub.f32 %v880, %v871
          %882 = vst [vmem:[%s7 + $0x10] sm:$0xff] %v881
          %v883 = vld [vmem:[#allocation3] sm:$0xff]
          %884 = vst [vmem:[%s8] sm:$0xff] %v883
        $region56: #{_lambda_.1} parent=39 // pred_fallthru
          _
        // Predicated region
        $region57: #{_lambda_.1} parent=39 // pred_check
          %p885 = pneg %p158
        $region58: #{_lambda_.1} parent=39 // pred_check_branch
          %887 = sbr.rel (%p885) target = $region60
        $region59: #{_lambda_.1} parent=39 // pred_region
          _
        $region60: #{_lambda_.1} parent=39 // pred_fallthru
          _
        // Predicated region
        $region61: #{_lambda_.1} parent=39 // pred_check
          %p888 = pneg %p179
        $region62: #{_lambda_.1} parent=39 // pred_check_branch
          %890 = sbr.rel (%p888) target = $region64
        $region63: #{_lambda_.1} parent=39 // pred_region
          _
        $region64: #{_lambda_.1} parent=39 // pred_fallthru
          _
        // Predicated region
        $region65: #{_lambda_.1} parent=39 // pred_check
          %p891 = pneg %p158
        $region66: #{_lambda_.1} parent=39 // pred_check_branch
          %893 = sbr.rel (%p891) target = $region68
        $region67: #{_lambda_.1} parent=39 // pred_region
          _
        $region68: #{_lambda_.1} parent=39 // pred_fallthru
          _
        // Predicated region
        $region69: #{_lambda_.1} parent=39 // pred_check
          %p894 = pneg %p179
        $region70: #{_lambda_.1} parent=39 // pred_check_branch
          %896 = sbr.rel (%p894) target = $region72
        $region71: #{_lambda_.1} parent=39 // pred_region
          _
        $region72: #{_lambda_.1} parent=39 // pred_fallthru
          _
      $region40: #{_lambda_.1} parent=5 // pred_fallthru
        _
      %p897 = scmp.le.s32.totalorder 2, %s25
      // Predicated region
      $region73: #{_lambda_.1} parent=5 // pred_check
        %p898 = pneg %p897
      $region74: #{_lambda_.1} parent=5 // pred_check_branch
        %900 = sbr.rel (%p898) target = $region76
      $region75: #{_lambda_.1} parent=5 // pred_region
        %s901 = ssub.s32 %s25, 2
      $region76: #{_lambda_.1} parent=5 // pred_fallthru
        _
    $region6: #{_lambda_.1} parent=1 // loop_footer
      %s29 = sadd.s32 1, %s25
    $region7: #{_lambda_.1} parent=1 // loop_footer_branch
      %24 = sbr.rel target = $region3
    $region8: #{_lambda_.1} parent=1 // loop_exit
      _
    %902 = vsyncpa [#allocation11], 1
    %s903 = scalar_lea.sflag [#allocation11], 1
    %904 = vsyncpa %s903, 1
    %905 = vsyncpa [#allocation13], 1
    %s906 = scalar_lea.sflag [#allocation13], 1
    %907 = vsyncpa %s906, 1
  %908 = vsyncmov [#allocation7]
  %s909 = vpop.sfrf %908
  %p910 = scmp.eq.s32.totalorder %s909, 0
  %p911 = pneg %p910
  %913 = shalt.err (%p911)
  %s914 = scalar_lea.sflag [#allocation7], 1
  %915 = vsyncmov %s914
  %s916 = vpop.sfrf %915
  %p917 = scmp.eq.s32.totalorder %s916, 0
  %p918 = pneg %p917
  %920 = shalt.err (%p918)
  %s921 = scalar_lea.sflag [#allocation7], 2
  %922 = vsyncmov %s921
  %s923 = vpop.sfrf %922
  %p924 = scmp.eq.s32.totalorder %s923, 0
  %p925 = pneg %p924
  %927 = shalt.err (%p925)
  %s928 = scalar_lea.sflag [#allocation7], 3
  %929 = vsyncmov %s928
  %s930 = vpop.sfrf %929
  %p931 = scmp.eq.s32.totalorder %s930, 0
  %p932 = pneg %p931
  %934 = shalt.err (%p932)
  %s935 = scalar_lea.sflag [#allocation7], 4
  %936 = vsyncmov %s935
  %s937 = vpop.sfrf %936
  %p938 = scmp.eq.s32.totalorder %s937, 0
  %p939 = pneg %p938
  %941 = shalt.err (%p939)
  %s942 = scalar_lea.sflag [#allocation7], 5
  %943 = vsyncmov %s942
  %s944 = vpop.sfrf %943
  %p945 = scmp.eq.s32.totalorder %s944, 0
  %p946 = pneg %p945
  %948 = shalt.err (%p946)
  %s949 = scalar_lea.sflag [#allocation7], 6
  %950 = vsyncmov %s949
  %s951 = vpop.sfrf %950
  %p952 = scmp.eq.s32.totalorder %s951, 0
  %p953 = pneg %p952
  %955 = shalt.err (%p953)
  %s956 = scalar_lea.sflag [#allocation7], 7
  %957 = vsyncmov %s956
  %s958 = vpop.sfrf %957
  %p959 = scmp.eq.s32.totalorder %s958, 0
  %p960 = pneg %p959
  %962 = shalt.err (%p960)

</llo_original>
